<compile_context>
chip_gen: v7x
topology: tpu7x:2x2x1
jax: 0.10.0
libtpu: 0.0.40
codegen_flags: <defaults>
</compile_context>

<pallas_src>
import math

import jax
import jax.numpy as jnp
from jax.experimental import pallas as pl
from jax.experimental.pallas import tpu as pltpu


def se_conv_block_kernel(x_ref, wlo_ref, whi_ref, sh_ref,
                         w1_ref, b1_ref, w2_ref, b2_ref, o_ref):
    # x_ref : (B*(Lp+1), 3*Cin)  "wide rows": row b*(Lp+1)+j holds the three
    #         padded input positions 3j, 3j+1, 3j+2 of sample b, channels on
    #         lanes (Cin per position).
    # wlo_ref/whi_ref: (3*Cin, 3*Cp) conv weights (BN scale folded) acting on
    #         wide row j / wide row j+1; output lanes are the 3 pooling
    #         phases, Cp channels each.
    # sh_ref: (1, 3*Cp)  folded conv-bias + BN shift, tiled per phase.
    # w1_ref: (Cp, Np), b1_ref: (1, Np)   squeeze 1x1 conv (channel padded)
    # w2_ref: (Np, Cp), b2_ref: (1, Cp)   excite 1x1 conv (channel padded)
    # o_ref : (B, Lp, Cp) gated pooled output (channel padded, lane dense)
    B, Lp, Cp = o_ref.shape
    Lq = Lp + 1
    R = x_ref.shape[0]          # B * Lq
    M = R - 1                   # last wide row only feeds a pad position

    xall = x_ref[...]                         # (B*Lq, 3*Cin)
    xlo = xall[0:M, :]                        # wide row v_{b, j}
    xhi = xall[1:M + 1, :]                    # wide row v_{b, j+1}

    # Conv1d(k=3, p=1) + folded BatchNorm + ReLU for all B samples and all
    # three pooling phases: one pair of MXU matmuls, lane-dense output.
    y = jnp.dot(xlo, wlo_ref[...], preferred_element_type=jnp.float32)
    y = y + jnp.dot(xhi, whi_ref[...], preferred_element_type=jnp.float32)
    y = jnp.maximum(y + sh_ref[...], 0.0)     # (M, 3*Cp)

    # MaxPool1d(3, stride=3): elementwise max of the three phase slabs,
    # entirely in registers (no scratch, no strided re-loads).
    pooled = jnp.maximum(jnp.maximum(y[:, 0:Cp], y[:, Cp:2 * Cp]),
                         y[:, 2 * Cp:3 * Cp])  # (M, Cp); row b*Lq + j

    # Squeeze: per-sample global max over the pooled length, stacked into a
    # single (B, Cp) matrix so the excitation MLP runs once per grid step.
    row_ids = jax.lax.broadcasted_iota(jnp.int32, (B, Cp), 0)
    z = jnp.zeros((B, Cp), jnp.float32)
    segs = []
    for b in range(B):                        # static unroll, B is small
        seg = pooled[b * Lq:b * Lq + Lp, :]   # (Lp, Cp); drops the pad row
        segs.append(seg)
        zb = jnp.max(seg, axis=0, keepdims=True)              # (1, Cp)
        z = jnp.where(row_ids == b, jnp.broadcast_to(zb, (B, Cp)), z)

    # Excitation: 1x1 conv -> ReLU -> 1x1 conv -> sigmoid, batched over B.
    s1 = jnp.maximum(
        jnp.dot(z, w1_ref[...], preferred_element_type=jnp.float32)
        + b1_ref[...], 0.0)                   # (B, Np)
    gate = jax.nn.sigmoid(
        jnp.dot(s1, w2_ref[...], preferred_element_type=jnp.float32)
        + b2_ref[...])                        # (B, Cp)

    for b in range(B):
        o_ref[b] = (segs[b] * gate[b:b + 1, :]).astype(o_ref.dtype)


def se_conv_block(x, params, *, samples_per_block=8):
    """x: (N, Cin, L) float32 in PyTorch NCL layout. Returns (N, Cout, L//3)."""
    N, Cin, L = x.shape
    assert L >= 3, "MaxPool1d(3, 3) needs L >= 3"
    w, b = params["w"], params["b"]
    gamma, beta = params["gamma"], params["beta"]
    mean, var = params["mean"], params["var"]
    w1, b1, w2, b2 = params["w1"], params["b1"], params["w2"], params["b2"]
    Cout = w.shape[0]
    Nsq = w1.shape[0]
    Lp = L // 3                      # pooled length
    Lq = Lp + 1                      # wide rows per sample (one pad row)
    S = 3 * Lq                       # padded per-sample length (>= L + 2)
    eps = 1e-5
    LANE = 128
    Cp = -(-Cout // LANE) * LANE     # channel dims padded to full lane width
    Np = -(-Nsq // LANE) * LANE
    f32 = jnp.float32

    # ---- parameter folding (tiny one-time transforms, plain JAX) ----
    scale = gamma / jnp.sqrt(var + eps)                         # (Cout,)
    wfold = jnp.transpose(w, (2, 1, 0)) * scale[None, None, :]  # [k, i, c]
    shift = b * scale + beta - mean * scale                     # (Cout,)

    # Wide-row conv weights: output column block p (pooling phase) and
    # channel c take tap k from wide-row chunk m of row j (w_lo, k = m - p)
    # or of row j+1 (w_hi, k = m + 3 - p).
    w_lo = jnp.zeros((3 * Cin, 3 * Cp), f32)
    w_hi = jnp.zeros((3 * Cin, 3 * Cp), f32)
    for p in range(3):
        for m in range(3):
            k = m - p
            if 0 <= k < 3:
                w_lo = w_lo.at[m * Cin:(m + 1) * Cin,
                               p * Cp:p * Cp + Cout].set(wfold[k])
            k = m + 3 - p
            if 0 <= k < 3:
                w_hi = w_hi.at[m * Cin:(m + 1) * Cin,
                               p * Cp:p * Cp + Cout].set(wfold[k])
    shift3 = jnp.zeros((1, 3 * Cp), f32)
    for p in range(3):
        shift3 = shift3.at[0, p * Cp:p * Cp + Cout].set(shift)

    # Squeeze/excite 1x1 convs, channel-padded to lane width (zeros).
    w1_p = jnp.zeros((Cp, Np), f32).at[:Cout, :Nsq].set(
        jnp.transpose(w1[:, :, 0]))
    b1_p = jnp.zeros((1, Np), f32).at[0, :Nsq].set(b1)
    w2_p = jnp.zeros((Np, Cp), f32).at[:Nsq, :Cout].set(
        jnp.transpose(w2[:, :, 0]))
    b2_p = jnp.zeros((1, Cp), f32).at[0, :Cout].set(b2)

    # ---- layout glue (fuses into one copy under jit) ----
    # B samples per grid step; the input block's sublane dim B*Lq must be a
    # multiple of 8.
    unit = 8 // math.gcd(Lq, 8)
    B = max(unit, (samples_per_block // unit) * unit)
    Npad = -(-N // B) * B

    x_nlc = jnp.transpose(x, (0, 2, 1)).astype(f32)             # (N, L, Cin)
    # 1 left halo row + right zero rows so each sample has S = 3*(Lp+1) rows,
    # plus zero samples to round the batch up to a multiple of B.
    x_pad = jnp.pad(x_nlc, ((0, Npad - N), (1, S - L - 1), (0, 0)))
    # Group every 3 padded positions into one "wide row" of 3*Cin lanes.
    x2 = x_pad.reshape(Npad * Lq, 3 * Cin)

    out_p = pl.pallas_call(
        se_conv_block_kernel,
        out_shape=jax.ShapeDtypeStruct((Npad, Lp, Cp), f32),
        grid_spec=pltpu.PrefetchScalarGridSpec(
            num_scalar_prefetch=0,
            grid=(Npad // B,),
            in_specs=[
                pl.BlockSpec((B * Lq, 3 * Cin), lambda g: (g, 0)),
                pl.BlockSpec((3 * Cin, 3 * Cp), lambda g: (0, 0)),
                pl.BlockSpec((3 * Cin, 3 * Cp), lambda g: (0, 0)),
                pl.BlockSpec((1, 3 * Cp), lambda g: (0, 0)),
                pl.BlockSpec((Cp, Np), lambda g: (0, 0)),
                pl.BlockSpec((1, Np), lambda g: (0, 0)),
                pl.BlockSpec((Np, Cp), lambda g: (0, 0)),
                pl.BlockSpec((1, Cp), lambda g: (0, 0)),
            ],
            out_specs=pl.BlockSpec((B, Lp, Cp), lambda g: (g, 0, 0)),
        ),
        compiler_params=pltpu.CompilerParams(
            dimension_semantics=("parallel",)),   # shards across v7x's 2 TCs
    )(x2, w_lo, w_hi, shift3, w1_p, b1_p, w2_p, b2_p)

    # Drop batch/channel padding, back to PyTorch NCL layout.
    return jnp.transpose(out_p[:N, :, :Cout], (0, 2, 1))


def reference(x, p):
    """Pure-JAX reference mirroring the PyTorch forward (BN in eval mode)."""
    eps = 1e-5
    N, Cin, L = x.shape
    Cout = p["w"].shape[0]
    Lp = L // 3
    xp = jnp.pad(x, ((0, 0), (0, 0), (1, 1)))
    conv = p["b"][None, :, None]
    for k in range(3):
        conv = conv + jnp.einsum('nil,oi->nol', xp[:, :, k:k + L],
                                 p["w"][:, :, k])
    bn = ((conv - p["mean"][None, :, None])
          / jnp.sqrt(p["var"][None, :, None] + eps)
          * p["gamma"][None, :, None] + p["beta"][None, :, None])
    act = jnp.maximum(bn, 0.0)
    pooled = act[:, :, :Lp * 3].reshape(N, Cout, Lp, 3).max(-1)
    z = pooled.max(-1)                                        # (N, Cout)
    s1 = jnp.maximum(jnp.einsum('no,so->ns', z, p["w1"][:, :, 0])
                     + p["b1"][None, :], 0.0)
    s2 = jax.nn.sigmoid(jnp.einsum('ns,os->no', s1, p["w2"][:, :, 0])
                        + p["b2"][None, :])
    return pooled * s2[:, :, None]


if __name__ == "__main__":
    N, ins, outs, L = 16, 4, 8, 24          # Lp = 8
    n_sq = int(outs * 0.5)

    key = jax.random.PRNGKey(0)
    ks = jax.random.split(key, 11)
    params = {
        "w": 0.2 * jax.random.normal(ks[0], (outs, ins, 3), jnp.float32),
        "b": 0.1 * jax.random.normal(ks[1], (outs,), jnp.float32),
        # Non-trivial BatchNorm1d running stats (eval mode) to exercise the
        # scale/shift folding.
        "gamma": 1.0 + 0.1 * jax.random.normal(ks[2], (outs,), jnp.float32),
        "beta": 0.1 * jax.random.normal(ks[3], (outs,), jnp.float32),
        "mean": 0.1 * jax.random.normal(ks[4], (outs,), jnp.float32),
        "var": 0.5 + jnp.abs(
            0.3 * jax.random.normal(ks[5], (outs,), jnp.float32)),
        "w1": 0.2 * jax.random.normal(ks[6], (n_sq, outs, 1), jnp.float32),
        "b1": 0.1 * jax.random.normal(ks[7], (n_sq,), jnp.float32),
        "w2": 0.2 * jax.random.normal(ks[8], (outs, n_sq, 1), jnp.float32),
        "b2": 0.1 * jax.random.normal(ks[9], (outs,), jnp.float32),
    }
    x = jax.random.normal(ks[10], (N, ins, L), jnp.float32)

    fn = jax.jit(lambda xx: se_conv_block(xx, params, samples_per_block=8))
    out = jax.block_until_ready(fn(x))
    ref = jax.block_until_ready(reference(x, params))

    assert out.shape == (N, outs, L // 3), out.shape
    assert jnp.allclose(out, ref, atol=1e-4, rtol=1e-4), \
        float(jnp.max(jnp.abs(out - ref)))
    print("KERNEL_OK")
</pallas_src>

<mosaic_0001>
module attributes {stable_mosaic.version = 11 : i64} {
  func.func @se_conv_block_kernel(%arg0: i32, %arg1: memref<72x12xf32, #tpu.memory_space<vmem>>, %arg2: memref<12x384xf32, #tpu.memory_space<vmem>>, %arg3: memref<12x384xf32, #tpu.memory_space<vmem>>, %arg4: memref<1x384xf32, #tpu.memory_space<vmem>>, %arg5: memref<128x128xf32, #tpu.memory_space<vmem>>, %arg6: memref<1x128xf32, #tpu.memory_space<vmem>>, %arg7: memref<128x128xf32, #tpu.memory_space<vmem>>, %arg8: memref<1x128xf32, #tpu.memory_space<vmem>>, %arg9: memref<8x8x128xf32, #tpu.memory_space<vmem>>) attributes {dimension_semantics = [#tpu.dimension_semantics<parallel>], iteration_bounds = array<i64: 2>, scalar_prefetch = 0 : i64, scratch_operands = 0 : i64, tpu.core_type = #tpu.core_type<tc>, window_params = [{transform_indices = @transform_0, window_bounds = array<i64: 72, 12>}, {pipeline_mode = #tpu.pipeline_mode<synchronous>, transform_indices = @transform_1, window_bounds = array<i64: 12, 384>}, {pipeline_mode = #tpu.pipeline_mode<synchronous>, transform_indices = @transform_2, window_bounds = array<i64: 12, 384>}, {pipeline_mode = #tpu.pipeline_mode<synchronous>, transform_indices = @transform_3, window_bounds = array<i64: 1, 384>}, {pipeline_mode = #tpu.pipeline_mode<synchronous>, transform_indices = @transform_4, window_bounds = array<i64: 128, 128>}, {pipeline_mode = #tpu.pipeline_mode<synchronous>, transform_indices = @transform_5, window_bounds = array<i64: 1, 128>}, {pipeline_mode = #tpu.pipeline_mode<synchronous>, transform_indices = @transform_6, window_bounds = array<i64: 128, 128>}, {pipeline_mode = #tpu.pipeline_mode<synchronous>, transform_indices = @transform_7, window_bounds = array<i64: 1, 128>}, {transform_indices = @transform_8, window_bounds = array<i64: 8, 8, 128>}]} {
    %c0 = arith.constant 0 : index
    %c0_0 = arith.constant 0 : index
    %0 = vector.load %arg1[%c0, %c0_0] : memref<72x12xf32, #tpu.memory_space<vmem>>, vector<72x12xf32>
    %1 = vector.extract_strided_slice %0 {offsets = [0, 0], sizes = [71, 12], strides = [1, 1]} : vector<72x12xf32> to vector<71x12xf32>
    %2 = vector.extract_strided_slice %0 {offsets = [1, 0], sizes = [71, 12], strides = [1, 1]} : vector<72x12xf32> to vector<71x12xf32>
    %c0_1 = arith.constant 0 : index
    %c0_2 = arith.constant 0 : index
    %3 = vector.load %arg2[%c0_1, %c0_2] : memref<12x384xf32, #tpu.memory_space<vmem>>, vector<12x384xf32>
    %cst = arith.constant dense<0.000000e+00> : vector<71x384xf32>
    %4 = tpu.matmul %1, %3, %cst {dimension_numbers = #tpu.dot_dimension_numbers<[1], [0], [0], [1], [0, 0, 1, 1], [], []>} : vector<71x12xf32>, vector<12x384xf32>, vector<71x384xf32> -> vector<71x384xf32>
    %c0_3 = arith.constant 0 : index
    %c0_4 = arith.constant 0 : index
    %5 = vector.load %arg3[%c0_3, %c0_4] : memref<12x384xf32, #tpu.memory_space<vmem>>, vector<12x384xf32>
    %cst_5 = arith.constant dense<0.000000e+00> : vector<71x384xf32>
    %6 = tpu.matmul %2, %5, %cst_5 {dimension_numbers = #tpu.dot_dimension_numbers<[1], [0], [0], [1], [0, 0, 1, 1], [], []>} : vector<71x12xf32>, vector<12x384xf32>, vector<71x384xf32> -> vector<71x384xf32>
    %7 = arith.addf %4, %6 : vector<71x384xf32>
    %c0_6 = arith.constant 0 : index
    %c0_7 = arith.constant 0 : index
    %8 = vector.load %arg4[%c0_6, %c0_7] : memref<1x384xf32, #tpu.memory_space<vmem>>, vector<1x384xf32>
    %9 = vector.broadcast %8 : vector<1x384xf32> to vector<71x384xf32>
    %10 = arith.addf %7, %9 : vector<71x384xf32>
    %cst_8 = arith.constant 0.000000e+00 : f32
    %11 = vector.broadcast %cst_8 : f32 to vector<71x384xf32>
    %12 = arith.maximumf %10, %11 : vector<71x384xf32>
    %13 = vector.extract_strided_slice %12 {offsets = [0, 0], sizes = [71, 128], strides = [1, 1]} : vector<71x384xf32> to vector<71x128xf32>
    %14 = vector.extract_strided_slice %12 {offsets = [0, 128], sizes = [71, 128], strides = [1, 1]} : vector<71x384xf32> to vector<71x128xf32>
    %15 = arith.maximumf %13, %14 : vector<71x128xf32>
    %16 = vector.extract_strided_slice %12 {offsets = [0, 256], sizes = [71, 128], strides = [1, 1]} : vector<71x384xf32> to vector<71x128xf32>
    %17 = arith.maximumf %15, %16 : vector<71x128xf32>
    %18 = tpu.iota {dimensions = array<i32: 0>} : vector<8x128xi32>
    %cst_9 = arith.constant 0.000000e+00 : f32
    %19 = vector.broadcast %cst_9 : f32 to vector<8x128xf32>
    %20 = vector.extract_strided_slice %17 {offsets = [0, 0], sizes = [8, 128], strides = [1, 1]} : vector<71x128xf32> to vector<8x128xf32>
    %cst_10 = arith.constant dense<0xFF800000> : vector<128xf32>
    %21 = vector.multi_reduction <maximumf>, %20, %cst_10 [0] : vector<8x128xf32> to vector<128xf32>
    %22 = vector.shape_cast %21 : vector<128xf32> to vector<1x128xf32>
    %c0_i32 = arith.constant 0 : i32
    %23 = vector.broadcast %c0_i32 : i32 to vector<8x128xi32>
    %24 = arith.cmpi eq, %18, %23 : vector<8x128xi32>
    %25 = vector.shape_cast %22 : vector<1x128xf32> to vector<1x128xf32>
    %26 = vector.broadcast %25 : vector<1x128xf32> to vector<8x128xf32>
    %27 = arith.select %24, %26, %19 : vector<8x128xi1>, vector<8x128xf32>
    %28 = vector.extract_strided_slice %17 {offsets = [9, 0], sizes = [8, 128], strides = [1, 1]} : vector<71x128xf32> to vector<8x128xf32>
    %cst_11 = arith.constant dense<0xFF800000> : vector<128xf32>
    %29 = vector.multi_reduction <maximumf>, %28, %cst_11 [0] : vector<8x128xf32> to vector<128xf32>
    %30 = vector.shape_cast %29 : vector<128xf32> to vector<1x128xf32>
    %c1_i32 = arith.constant 1 : i32
    %31 = vector.broadcast %c1_i32 : i32 to vector<8x128xi32>
    %32 = arith.cmpi eq, %18, %31 : vector<8x128xi32>
    %33 = vector.shape_cast %30 : vector<1x128xf32> to vector<1x128xf32>
    %34 = vector.broadcast %33 : vector<1x128xf32> to vector<8x128xf32>
    %35 = arith.select %32, %34, %27 : vector<8x128xi1>, vector<8x128xf32>
    %36 = vector.extract_strided_slice %17 {offsets = [18, 0], sizes = [8, 128], strides = [1, 1]} : vector<71x128xf32> to vector<8x128xf32>
    %cst_12 = arith.constant dense<0xFF800000> : vector<128xf32>
    %37 = vector.multi_reduction <maximumf>, %36, %cst_12 [0] : vector<8x128xf32> to vector<128xf32>
    %38 = vector.shape_cast %37 : vector<128xf32> to vector<1x128xf32>
    %c2_i32 = arith.constant 2 : i32
    %39 = vector.broadcast %c2_i32 : i32 to vector<8x128xi32>
    %40 = arith.cmpi eq, %18, %39 : vector<8x128xi32>
    %41 = vector.shape_cast %38 : vector<1x128xf32> to vector<1x128xf32>
    %42 = vector.broadcast %41 : vector<1x128xf32> to vector<8x128xf32>
    %43 = arith.select %40, %42, %35 : vector<8x128xi1>, vector<8x128xf32>
    %44 = vector.extract_strided_slice %17 {offsets = [27, 0], sizes = [8, 128], strides = [1, 1]} : vector<71x128xf32> to vector<8x128xf32>
    %cst_13 = arith.constant dense<0xFF800000> : vector<128xf32>
    %45 = vector.multi_reduction <maximumf>, %44, %cst_13 [0] : vector<8x128xf32> to vector<128xf32>
    %46 = vector.shape_cast %45 : vector<128xf32> to vector<1x128xf32>
    %c3_i32 = arith.constant 3 : i32
    %47 = vector.broadcast %c3_i32 : i32 to vector<8x128xi32>
    %48 = arith.cmpi eq, %18, %47 : vector<8x128xi32>
    %49 = vector.shape_cast %46 : vector<1x128xf32> to vector<1x128xf32>
    %50 = vector.broadcast %49 : vector<1x128xf32> to vector<8x128xf32>
    %51 = arith.select %48, %50, %43 : vector<8x128xi1>, vector<8x128xf32>
    %52 = vector.extract_strided_slice %17 {offsets = [36, 0], sizes = [8, 128], strides = [1, 1]} : vector<71x128xf32> to vector<8x128xf32>
    %cst_14 = arith.constant dense<0xFF800000> : vector<128xf32>
    %53 = vector.multi_reduction <maximumf>, %52, %cst_14 [0] : vector<8x128xf32> to vector<128xf32>
    %54 = vector.shape_cast %53 : vector<128xf32> to vector<1x128xf32>
    %c4_i32 = arith.constant 4 : i32
    %55 = vector.broadcast %c4_i32 : i32 to vector<8x128xi32>
    %56 = arith.cmpi eq, %18, %55 : vector<8x128xi32>
    %57 = vector.shape_cast %54 : vector<1x128xf32> to vector<1x128xf32>
    %58 = vector.broadcast %57 : vector<1x128xf32> to vector<8x128xf32>
    %59 = arith.select %56, %58, %51 : vector<8x128xi1>, vector<8x128xf32>
    %60 = vector.extract_strided_slice %17 {offsets = [45, 0], sizes = [8, 128], strides = [1, 1]} : vector<71x128xf32> to vector<8x128xf32>
    %cst_15 = arith.constant dense<0xFF800000> : vector<128xf32>
    %61 = vector.multi_reduction <maximumf>, %60, %cst_15 [0] : vector<8x128xf32> to vector<128xf32>
    %62 = vector.shape_cast %61 : vector<128xf32> to vector<1x128xf32>
    %c5_i32 = arith.constant 5 : i32
    %63 = vector.broadcast %c5_i32 : i32 to vector<8x128xi32>
    %64 = arith.cmpi eq, %18, %63 : vector<8x128xi32>
    %65 = vector.shape_cast %62 : vector<1x128xf32> to vector<1x128xf32>
    %66 = vector.broadcast %65 : vector<1x128xf32> to vector<8x128xf32>
    %67 = arith.select %64, %66, %59 : vector<8x128xi1>, vector<8x128xf32>
    %68 = vector.extract_strided_slice %17 {offsets = [54, 0], sizes = [8, 128], strides = [1, 1]} : vector<71x128xf32> to vector<8x128xf32>
    %cst_16 = arith.constant dense<0xFF800000> : vector<128xf32>
    %69 = vector.multi_reduction <maximumf>, %68, %cst_16 [0] : vector<8x128xf32> to vector<128xf32>
    %70 = vector.shape_cast %69 : vector<128xf32> to vector<1x128xf32>
    %c6_i32 = arith.constant 6 : i32
    %71 = vector.broadcast %c6_i32 : i32 to vector<8x128xi32>
    %72 = arith.cmpi eq, %18, %71 : vector<8x128xi32>
    %73 = vector.shape_cast %70 : vector<1x128xf32> to vector<1x128xf32>
    %74 = vector.broadcast %73 : vector<1x128xf32> to vector<8x128xf32>
    %75 = arith.select %72, %74, %67 : vector<8x128xi1>, vector<8x128xf32>
    %76 = vector.extract_strided_slice %17 {offsets = [63, 0], sizes = [8, 128], strides = [1, 1]} : vector<71x128xf32> to vector<8x128xf32>
    %cst_17 = arith.constant dense<0xFF800000> : vector<128xf32>
    %77 = vector.multi_reduction <maximumf>, %76, %cst_17 [0] : vector<8x128xf32> to vector<128xf32>
    %78 = vector.shape_cast %77 : vector<128xf32> to vector<1x128xf32>
    %c7_i32 = arith.constant 7 : i32
    %79 = vector.broadcast %c7_i32 : i32 to vector<8x128xi32>
    %80 = arith.cmpi eq, %18, %79 : vector<8x128xi32>
    %81 = vector.shape_cast %78 : vector<1x128xf32> to vector<1x128xf32>
    %82 = vector.broadcast %81 : vector<1x128xf32> to vector<8x128xf32>
    %83 = arith.select %80, %82, %75 : vector<8x128xi1>, vector<8x128xf32>
    %c0_18 = arith.constant 0 : index
    %c0_19 = arith.constant 0 : index
    %84 = vector.load %arg5[%c0_18, %c0_19] : memref<128x128xf32, #tpu.memory_space<vmem>>, vector<128x128xf32>
    %cst_20 = arith.constant dense<0.000000e+00> : vector<8x128xf32>
    %85 = tpu.matmul %83, %84, %cst_20 {dimension_numbers = #tpu.dot_dimension_numbers<[1], [0], [0], [1], [0, 0, 1, 1], [], []>} : vector<8x128xf32>, vector<128x128xf32>, vector<8x128xf32> -> vector<8x128xf32>
    %c0_21 = arith.constant 0 : index
    %c0_22 = arith.constant 0 : index
    %86 = vector.load %arg6[%c0_21, %c0_22] : memref<1x128xf32, #tpu.memory_space<vmem>>, vector<1x128xf32>
    %87 = vector.broadcast %86 : vector<1x128xf32> to vector<8x128xf32>
    %88 = arith.addf %85, %87 : vector<8x128xf32>
    %cst_23 = arith.constant 0.000000e+00 : f32
    %89 = vector.broadcast %cst_23 : f32 to vector<8x128xf32>
    %90 = arith.maximumf %88, %89 : vector<8x128xf32>
    %c0_24 = arith.constant 0 : index
    %c0_25 = arith.constant 0 : index
    %91 = vector.load %arg7[%c0_24, %c0_25] : memref<128x128xf32, #tpu.memory_space<vmem>>, vector<128x128xf32>
    %cst_26 = arith.constant dense<0.000000e+00> : vector<8x128xf32>
    %92 = tpu.matmul %90, %91, %cst_26 {dimension_numbers = #tpu.dot_dimension_numbers<[1], [0], [0], [1], [0, 0, 1, 1], [], []>} : vector<8x128xf32>, vector<128x128xf32>, vector<8x128xf32> -> vector<8x128xf32>
    %c0_27 = arith.constant 0 : index
    %c0_28 = arith.constant 0 : index
    %93 = vector.load %arg8[%c0_27, %c0_28] : memref<1x128xf32, #tpu.memory_space<vmem>>, vector<1x128xf32>
    %94 = vector.broadcast %93 : vector<1x128xf32> to vector<8x128xf32>
    %95 = arith.addf %92, %94 : vector<8x128xf32>
    %96 = arith.negf %95 : vector<8x128xf32>
    %97 = math.exp %96 : vector<8x128xf32>
    %cst_29 = arith.constant 1.000000e+00 : f32
    %98 = vector.broadcast %cst_29 : f32 to vector<8x128xf32>
    %99 = arith.addf %98, %97 : vector<8x128xf32>
    %100 = arith.divf %98, %99 : vector<8x128xf32>
    %101 = vector.extract_strided_slice %100 {offsets = [0, 0], sizes = [1, 128], strides = [1, 1]} : vector<8x128xf32> to vector<1x128xf32>
    %102 = vector.broadcast %101 : vector<1x128xf32> to vector<8x128xf32>
    %103 = arith.mulf %20, %102 : vector<8x128xf32>
    %c0_30 = arith.constant 0 : index
    %c0_31 = arith.constant 0 : index
    %c0_32 = arith.constant 0 : index
    %104 = vector.load %arg9[%c0_30, %c0_31, %c0_32] : memref<8x8x128xf32, #tpu.memory_space<vmem>>, vector<1x8x128xf32>
    %105 = vector.shape_cast %104 : vector<1x8x128xf32> to vector<8x128xf32>
    %106 = vector.shape_cast %103 : vector<8x128xf32> to vector<1x8x128xf32>
    tpu.vector_store %arg9[%c0_30, %c0_31, %c0_32], %106 {strides = array<i32>} : memref<8x8x128xf32, #tpu.memory_space<vmem>>, vector<1x8x128xf32>,
    %107 = vector.extract_strided_slice %100 {offsets = [1, 0], sizes = [1, 128], strides = [1, 1]} : vector<8x128xf32> to vector<1x128xf32>
    %108 = vector.broadcast %107 : vector<1x128xf32> to vector<8x128xf32>
    %109 = arith.mulf %28, %108 : vector<8x128xf32>
    %c1 = arith.constant 1 : index
    %c0_33 = arith.constant 0 : index
    %c0_34 = arith.constant 0 : index
    %110 = vector.load %arg9[%c1, %c0_33, %c0_34] : memref<8x8x128xf32, #tpu.memory_space<vmem>>, vector<1x8x128xf32>
    %111 = vector.shape_cast %110 : vector<1x8x128xf32> to vector<8x128xf32>
    %112 = vector.shape_cast %109 : vector<8x128xf32> to vector<1x8x128xf32>
    tpu.vector_store %arg9[%c1, %c0_33, %c0_34], %112 {strides = array<i32>} : memref<8x8x128xf32, #tpu.memory_space<vmem>>, vector<1x8x128xf32>,
    %113 = vector.extract_strided_slice %100 {offsets = [2, 0], sizes = [1, 128], strides = [1, 1]} : vector<8x128xf32> to vector<1x128xf32>
    %114 = vector.broadcast %113 : vector<1x128xf32> to vector<8x128xf32>
    %115 = arith.mulf %36, %114 : vector<8x128xf32>
    %c2 = arith.constant 2 : index
    %c0_35 = arith.constant 0 : index
    %c0_36 = arith.constant 0 : index
    %116 = vector.load %arg9[%c2, %c0_35, %c0_36] : memref<8x8x128xf32, #tpu.memory_space<vmem>>, vector<1x8x128xf32>
    %117 = vector.shape_cast %116 : vector<1x8x128xf32> to vector<8x128xf32>
    %118 = vector.shape_cast %115 : vector<8x128xf32> to vector<1x8x128xf32>
    tpu.vector_store %arg9[%c2, %c0_35, %c0_36], %118 {strides = array<i32>} : memref<8x8x128xf32, #tpu.memory_space<vmem>>, vector<1x8x128xf32>,
    %119 = vector.extract_strided_slice %100 {offsets = [3, 0], sizes = [1, 128], strides = [1, 1]} : vector<8x128xf32> to vector<1x128xf32>
    %120 = vector.broadcast %119 : vector<1x128xf32> to vector<8x128xf32>
    %121 = arith.mulf %44, %120 : vector<8x128xf32>
    %c3 = arith.constant 3 : index
    %c0_37 = arith.constant 0 : index
    %c0_38 = arith.constant 0 : index
    %122 = vector.load %arg9[%c3, %c0_37, %c0_38] : memref<8x8x128xf32, #tpu.memory_space<vmem>>, vector<1x8x128xf32>
    %123 = vector.shape_cast %122 : vector<1x8x128xf32> to vector<8x128xf32>
    %124 = vector.shape_cast %121 : vector<8x128xf32> to vector<1x8x128xf32>
    tpu.vector_store %arg9[%c3, %c0_37, %c0_38], %124 {strides = array<i32>} : memref<8x8x128xf32, #tpu.memory_space<vmem>>, vector<1x8x128xf32>,
    %125 = vector.extract_strided_slice %100 {offsets = [4, 0], sizes = [1, 128], strides = [1, 1]} : vector<8x128xf32> to vector<1x128xf32>
    %126 = vector.broadcast %125 : vector<1x128xf32> to vector<8x128xf32>
    %127 = arith.mulf %52, %126 : vector<8x128xf32>
    %c4 = arith.constant 4 : index
    %c0_39 = arith.constant 0 : index
    %c0_40 = arith.constant 0 : index
    %128 = vector.load %arg9[%c4, %c0_39, %c0_40] : memref<8x8x128xf32, #tpu.memory_space<vmem>>, vector<1x8x128xf32>
    %129 = vector.shape_cast %128 : vector<1x8x128xf32> to vector<8x128xf32>
    %130 = vector.shape_cast %127 : vector<8x128xf32> to vector<1x8x128xf32>
    tpu.vector_store %arg9[%c4, %c0_39, %c0_40], %130 {strides = array<i32>} : memref<8x8x128xf32, #tpu.memory_space<vmem>>, vector<1x8x128xf32>,
    %131 = vector.extract_strided_slice %100 {offsets = [5, 0], sizes = [1, 128], strides = [1, 1]} : vector<8x128xf32> to vector<1x128xf32>
    %132 = vector.broadcast %131 : vector<1x128xf32> to vector<8x128xf32>
    %133 = arith.mulf %60, %132 : vector<8x128xf32>
    %c5 = arith.constant 5 : index
    %c0_41 = arith.constant 0 : index
    %c0_42 = arith.constant 0 : index
    %134 = vector.load %arg9[%c5, %c0_41, %c0_42] : memref<8x8x128xf32, #tpu.memory_space<vmem>>, vector<1x8x128xf32>
    %135 = vector.shape_cast %134 : vector<1x8x128xf32> to vector<8x128xf32>
    %136 = vector.shape_cast %133 : vector<8x128xf32> to vector<1x8x128xf32>
    tpu.vector_store %arg9[%c5, %c0_41, %c0_42], %136 {strides = array<i32>} : memref<8x8x128xf32, #tpu.memory_space<vmem>>, vector<1x8x128xf32>,
    %137 = vector.extract_strided_slice %100 {offsets = [6, 0], sizes = [1, 128], strides = [1, 1]} : vector<8x128xf32> to vector<1x128xf32>
    %138 = vector.broadcast %137 : vector<1x128xf32> to vector<8x128xf32>
    %139 = arith.mulf %68, %138 : vector<8x128xf32>
    %c6 = arith.constant 6 : index
    %c0_43 = arith.constant 0 : index
    %c0_44 = arith.constant 0 : index
    %140 = vector.load %arg9[%c6, %c0_43, %c0_44] : memref<8x8x128xf32, #tpu.memory_space<vmem>>, vector<1x8x128xf32>
    %141 = vector.shape_cast %140 : vector<1x8x128xf32> to vector<8x128xf32>
    %142 = vector.shape_cast %139 : vector<8x128xf32> to vector<1x8x128xf32>
    tpu.vector_store %arg9[%c6, %c0_43, %c0_44], %142 {strides = array<i32>} : memref<8x8x128xf32, #tpu.memory_space<vmem>>, vector<1x8x128xf32>,
    %143 = vector.extract_strided_slice %100 {offsets = [7, 0], sizes = [1, 128], strides = [1, 1]} : vector<8x128xf32> to vector<1x128xf32>
    %144 = vector.broadcast %143 : vector<1x128xf32> to vector<8x128xf32>
    %145 = arith.mulf %76, %144 : vector<8x128xf32>
    %c7 = arith.constant 7 : index
    %c0_45 = arith.constant 0 : index
    %c0_46 = arith.constant 0 : index
    %146 = vector.load %arg9[%c7, %c0_45, %c0_46] : memref<8x8x128xf32, #tpu.memory_space<vmem>>, vector<1x8x128xf32>
    %147 = vector.shape_cast %146 : vector<1x8x128xf32> to vector<8x128xf32>
    %148 = vector.shape_cast %145 : vector<8x128xf32> to vector<1x8x128xf32>
    tpu.vector_store %arg9[%c7, %c0_45, %c0_46], %148 {strides = array<i32>} : memref<8x8x128xf32, #tpu.memory_space<vmem>>, vector<1x8x128xf32>,
    return
  }
  func.func @transform_0(%arg0: i32) -> (i32, i32) {
    %c0_i32 = arith.constant 0 : i32
    %c0_i32_0 = arith.constant 0 : i32
    return %arg0, %c0_i32 : i32, i32
  }
  func.func @transform_1(%arg0: i32) -> (i32, i32) {
    %c0_i32 = arith.constant 0 : i32
    %c0_i32_0 = arith.constant 0 : i32
    %c0_i32_1 = arith.constant 0 : i32
    return %c0_i32, %c0_i32_0 : i32, i32
  }
  func.func @transform_2(%arg0: i32) -> (i32, i32) {
    %c0_i32 = arith.constant 0 : i32
    %c0_i32_0 = arith.constant 0 : i32
    %c0_i32_1 = arith.constant 0 : i32
    return %c0_i32, %c0_i32_0 : i32, i32
  }
  func.func @transform_3(%arg0: i32) -> (i32, i32) {
    %c0_i32 = arith.constant 0 : i32
    %c0_i32_0 = arith.constant 0 : i32
    %c0_i32_1 = arith.constant 0 : i32
    return %c0_i32, %c0_i32_0 : i32, i32
  }
  func.func @transform_4(%arg0: i32) -> (i32, i32) {
    %c0_i32 = arith.constant 0 : i32
    %c0_i32_0 = arith.constant 0 : i32
    %c0_i32_1 = arith.constant 0 : i32
    return %c0_i32, %c0_i32_0 : i32, i32
  }
  func.func @transform_5(%arg0: i32) -> (i32, i32) {
    %c0_i32 = arith.constant 0 : i32
    %c0_i32_0 = arith.constant 0 : i32
    %c0_i32_1 = arith.constant 0 : i32
    return %c0_i32, %c0_i32_0 : i32, i32
  }
  func.func @transform_6(%arg0: i32) -> (i32, i32) {
    %c0_i32 = arith.constant 0 : i32
    %c0_i32_0 = arith.constant 0 : i32
    %c0_i32_1 = arith.constant 0 : i32
    return %c0_i32, %c0_i32_0 : i32, i32
  }
  func.func @transform_7(%arg0: i32) -> (i32, i32) {
    %c0_i32 = arith.constant 0 : i32
    %c0_i32_0 = arith.constant 0 : i32
    %c0_i32_1 = arith.constant 0 : i32
    return %c0_i32, %c0_i32_0 : i32, i32
  }
  func.func @transform_8(%arg0: i32) -> (i32, i32, i32) {
    %c0_i32 = arith.constant 0 : i32
    %c0_i32_0 = arith.constant 0 : i32
    %c0_i32_1 = arith.constant 0 : i32
    return %arg0, %c0_i32, %c0_i32_0 : i32, i32, i32
  }
}

</mosaic_0001>

<llo_original>
// kernel: _lambda_.1
$region0: #{_lambda_.1}
  #allocation0 [shape = 'u32[]', space=smem, size = 0x4, offset = 0x4, fixed_abs, tag = 'smem constant byte address 0x4 - core index']
  #allocation1 [shape = 'u32[144,128]{1,0:T(1,128)}', space=vmem, size = 0x12000, scoped, tag = 'internal scratch']
  %s0 = inlined_call_operand.vmem [shape: f32[144,12], index: 0, kind: input, shape index: {}]
  %s1 = inlined_call_operand.vmem [shape: f32[12,384], index: 1, kind: input, shape index: {}]
  %s2 = inlined_call_operand.vmem [shape: f32[12,384], index: 2, kind: input, shape index: {}]
  %s3 = inlined_call_operand.vmem [shape: f32[1,384], index: 3, kind: input, shape index: {}]
  %s4 = inlined_call_operand.vmem [shape: f32[128,128], index: 4, kind: input, shape index: {}]
  %s5 = inlined_call_operand.vmem [shape: f32[1,128], index: 5, kind: input, shape index: {}]
  %s6 = inlined_call_operand.vmem [shape: f32[128,128], index: 6, kind: input, shape index: {}]
  %s7 = inlined_call_operand.vmem [shape: f32[1,128], index: 7, kind: input, shape index: {}]
  %s8 = inlined_call_operand.vmem [shape: f32[16,8,128], index: 8, kind: output, shape index: {}]
  %s9 = sld [smem:[#allocation0]]
  $region65: #{_lambda_.1} parent=0
    _
  %s11 = ssub.s32 1, %s9
  %s12 = scalar_select 0, %s11, %s9
  loop: start=0, step=1, limit=4
  $region2: #{_lambda_.1} parent=0 // loop_pre_header
    _
  $region3: #{_lambda_.1} parent=0 // loop_header
    %s14 = sphi 0, %s18
    %p15 = scmp.ge.s32.totalorder %s14, 4
    %s24 = sphi 0, %s26
    %s27 = sphi 0, %s24
    %s28 = sphi 0, %s27
    %s44 = sphi 0, %s28
    %s48 = sphi 0, %s48
    %s50 = sphi 0, %s48
    %s51 = sphi 0, %s50
    %s65 = sphi 0, %s51
    %s69 = sphi 0, %s69
    %s71 = sphi 0, %s69
    %s72 = sphi 0, %s71
    %s86 = sphi 0, %s72
    %s90 = sphi 0, %s90
    %s92 = sphi 0, %s90
    %s93 = sphi 0, %s92
    %s107 = sphi 0, %s93
    %s111 = sphi 0, %s111
    %s113 = sphi 0, %s111
    %s114 = sphi 0, %s113
    %s128 = sphi 0, %s114
    %s132 = sphi 0, %s132
    %s134 = sphi 0, %s132
    %s135 = sphi 0, %s134
    %s149 = sphi 0, %s135
    %s153 = sphi 0, %s153
    %s155 = sphi 0, %s153
    %s156 = sphi 0, %s155
    %s170 = sphi 0, %s156
    %s174 = sphi 0, %s174
    %s176 = sphi 0, %s174
    %s177 = sphi 0, %s176
    %s191 = sphi 0, %s177
    %s197 = sphi 0, %s199
    %s200 = sphi 0, %s197
    %s201 = sphi 0, %s200
    %s217 = sphi 0, %s201
  $region4: #{_lambda_.1} parent=0 // loop_header_branch
    %17 = sbr.rel (%p15) target = $region8
  $region5: #{_lambda_.1} parent=0 // loop_body
    %s19 = ssub.s32 %s14, 1
    %s20 = ssub.s32 %s14, 2
    %s21 = sadd.s32 %s14, 1
    %s22 = ssub.s32 %s14, %s21
    %p23 = scmp.eq.s32.totalorder %s22, 0
    %s25 = sadd.s32 %s24, 1
    %s26 = scalar_select %p23, %s24, %s25
    %p29 = pneg %p23
    %p30 = scmp.eq.s32.totalorder %s14, 1
    %p31 = por %p29, %p30
    %p32 = scmp.ne.s32.totalorder %s24, %s27
    %p33 = scmp.eq.s32.totalorder %s14, 0
    %p34 = por %p32, %p33
    %p35 = scmp.ne.s32.totalorder %s24, %s27
    %p36 = scmp.eq.s32.totalorder %s19, 1
    %p37 = por %p35, %p36
    %p38 = scmp.ne.s32.totalorder %s27, %s28
    %p39 = scmp.eq.s32.totalorder %s19, 0
    %p40 = por %p38, %p39
    %p41 = scmp.ne.s32.totalorder %s27, %s28
    %p42 = scmp.eq.s32.totalorder %s20, 1
    %p43 = por %p41, %p42
    %p45 = scmp.ne.s32.totalorder %s28, %s44
    %p46 = scmp.eq.s32.totalorder %s20, 0
    %p47 = por %p45, %p46
    %s49 = sadd.s32 %s48, 1
    %p52 = scmp.eq.s32.totalorder %s14, 1
    %p53 = scmp.ne.s32.totalorder %s48, %s50
    %p54 = scmp.eq.s32.totalorder %s14, 0
    %p55 = por %p53, %p54
    %p56 = scmp.ne.s32.totalorder %s48, %s50
    %p57 = scmp.eq.s32.totalorder %s19, 1
    %p58 = por %p56, %p57
    %p59 = scmp.ne.s32.totalorder %s50, %s51
    %p60 = scmp.eq.s32.totalorder %s19, 0
    %p61 = por %p59, %p60
    %p62 = scmp.ne.s32.totalorder %s50, %s51
    %p63 = scmp.eq.s32.totalorder %s20, 1
    %p64 = por %p62, %p63
    %p66 = scmp.ne.s32.totalorder %s51, %s65
    %p67 = scmp.eq.s32.totalorder %s20, 0
    %p68 = por %p66, %p67
    %s70 = sadd.s32 %s69, 1
    %p73 = scmp.eq.s32.totalorder %s14, 1
    %p74 = scmp.ne.s32.totalorder %s69, %s71
    %p75 = scmp.eq.s32.totalorder %s14, 0
    %p76 = por %p74, %p75
    %p77 = scmp.ne.s32.totalorder %s69, %s71
    %p78 = scmp.eq.s32.totalorder %s19, 1
    %p79 = por %p77, %p78
    %p80 = scmp.ne.s32.totalorder %s71, %s72
    %p81 = scmp.eq.s32.totalorder %s19, 0
    %p82 = por %p80, %p81
    %p83 = scmp.ne.s32.totalorder %s71, %s72
    %p84 = scmp.eq.s32.totalorder %s20, 1
    %p85 = por %p83, %p84
    %p87 = scmp.ne.s32.totalorder %s72, %s86
    %p88 = scmp.eq.s32.totalorder %s20, 0
    %p89 = por %p87, %p88
    %s91 = sadd.s32 %s90, 1
    %p94 = scmp.eq.s32.totalorder %s14, 1
    %p95 = scmp.ne.s32.totalorder %s90, %s92
    %p96 = scmp.eq.s32.totalorder %s14, 0
    %p97 = por %p95, %p96
    %p98 = scmp.ne.s32.totalorder %s90, %s92
    %p99 = scmp.eq.s32.totalorder %s19, 1
    %p100 = por %p98, %p99
    %p101 = scmp.ne.s32.totalorder %s92, %s93
    %p102 = scmp.eq.s32.totalorder %s19, 0
    %p103 = por %p101, %p102
    %p104 = scmp.ne.s32.totalorder %s92, %s93
    %p105 = scmp.eq.s32.totalorder %s20, 1
    %p106 = por %p104, %p105
    %p108 = scmp.ne.s32.totalorder %s93, %s107
    %p109 = scmp.eq.s32.totalorder %s20, 0
    %p110 = por %p108, %p109
    %s112 = sadd.s32 %s111, 1
    %p115 = scmp.eq.s32.totalorder %s14, 1
    %p116 = scmp.ne.s32.totalorder %s111, %s113
    %p117 = scmp.eq.s32.totalorder %s14, 0
    %p118 = por %p116, %p117
    %p119 = scmp.ne.s32.totalorder %s111, %s113
    %p120 = scmp.eq.s32.totalorder %s19, 1
    %p121 = por %p119, %p120
    %p122 = scmp.ne.s32.totalorder %s113, %s114
    %p123 = scmp.eq.s32.totalorder %s19, 0
    %p124 = por %p122, %p123
    %p125 = scmp.ne.s32.totalorder %s113, %s114
    %p126 = scmp.eq.s32.totalorder %s20, 1
    %p127 = por %p125, %p126
    %p129 = scmp.ne.s32.totalorder %s114, %s128
    %p130 = scmp.eq.s32.totalorder %s20, 0
    %p131 = por %p129, %p130
    %s133 = sadd.s32 %s132, 1
    %p136 = scmp.eq.s32.totalorder %s14, 1
    %p137 = scmp.ne.s32.totalorder %s132, %s134
    %p138 = scmp.eq.s32.totalorder %s14, 0
    %p139 = por %p137, %p138
    %p140 = scmp.ne.s32.totalorder %s132, %s134
    %p141 = scmp.eq.s32.totalorder %s19, 1
    %p142 = por %p140, %p141
    %p143 = scmp.ne.s32.totalorder %s134, %s135
    %p144 = scmp.eq.s32.totalorder %s19, 0
    %p145 = por %p143, %p144
    %p146 = scmp.ne.s32.totalorder %s134, %s135
    %p147 = scmp.eq.s32.totalorder %s20, 1
    %p148 = por %p146, %p147
    %p150 = scmp.ne.s32.totalorder %s135, %s149
    %p151 = scmp.eq.s32.totalorder %s20, 0
    %p152 = por %p150, %p151
    %s154 = sadd.s32 %s153, 1
    %p157 = scmp.eq.s32.totalorder %s14, 1
    %p158 = scmp.ne.s32.totalorder %s153, %s155
    %p159 = scmp.eq.s32.totalorder %s14, 0
    %p160 = por %p158, %p159
    %p161 = scmp.ne.s32.totalorder %s153, %s155
    %p162 = scmp.eq.s32.totalorder %s19, 1
    %p163 = por %p161, %p162
    %p164 = scmp.ne.s32.totalorder %s155, %s156
    %p165 = scmp.eq.s32.totalorder %s19, 0
    %p166 = por %p164, %p165
    %p167 = scmp.ne.s32.totalorder %s155, %s156
    %p168 = scmp.eq.s32.totalorder %s20, 1
    %p169 = por %p167, %p168
    %p171 = scmp.ne.s32.totalorder %s156, %s170
    %p172 = scmp.eq.s32.totalorder %s20, 0
    %p173 = por %p171, %p172
    %s175 = sadd.s32 %s174, 1
    %p178 = scmp.eq.s32.totalorder %s14, 1
    %p179 = scmp.ne.s32.totalorder %s174, %s176
    %p180 = scmp.eq.s32.totalorder %s14, 0
    %p181 = por %p179, %p180
    %p182 = scmp.ne.s32.totalorder %s174, %s176
    %p183 = scmp.eq.s32.totalorder %s19, 1
    %p184 = por %p182, %p183
    %p185 = scmp.ne.s32.totalorder %s176, %s177
    %p186 = scmp.eq.s32.totalorder %s19, 0
    %p187 = por %p185, %p186
    %p188 = scmp.ne.s32.totalorder %s176, %s177
    %p189 = scmp.eq.s32.totalorder %s20, 1
    %p190 = por %p188, %p189
    %p192 = scmp.ne.s32.totalorder %s177, %s191
    %p193 = scmp.eq.s32.totalorder %s20, 0
    %p194 = por %p192, %p193
    %s195 = ssub.s32 %s14, %s21
    %p196 = scmp.eq.s32.totalorder %s195, 0
    %s198 = sadd.s32 %s197, 1
    %s199 = scalar_select %p196, %s197, %s198
    %p202 = pneg %p196
    %p203 = scmp.eq.s32.totalorder %s14, 1
    %p204 = por %p202, %p203
    %p205 = scmp.ne.s32.totalorder %s197, %s200
    %p206 = scmp.eq.s32.totalorder %s14, 0
    %p207 = por %p205, %p206
    %p208 = scmp.ne.s32.totalorder %s197, %s200
    %p209 = scmp.eq.s32.totalorder %s19, 1
    %p210 = por %p208, %p209
    %p211 = scmp.ne.s32.totalorder %s200, %s201
    %p212 = scmp.eq.s32.totalorder %s19, 0
    %p213 = por %p211, %p212
    %p214 = scmp.ne.s32.totalorder %s200, %s201
    %p215 = scmp.eq.s32.totalorder %s20, 1
    %p216 = por %p214, %p215
    %p218 = scmp.ne.s32.totalorder %s201, %s217
    %p219 = scmp.eq.s32.totalorder %s20, 0
    %p220 = por %p218, %p219
    %p221 = scmp.le.s32.totalorder 1, %s14
    %p222 = scmp.lt.s32.totalorder %s14, 3
    %p223 = pnand %p221, %p222
    %p224 = pneg %p223
    // Predicated region
    $region9: #{_lambda_.1} parent=5 // pred_check
      _
    $region10: #{_lambda_.1} parent=5 // pred_check_branch
      %226 = sbr.rel (%p223) target = $region12
    $region11: #{_lambda_.1} parent=5 // pred_region
      %s227 = ssub.s32 %s14, 1
      // Predicated region
      $region13: #{_lambda_.1} parent=11 // pred_check
        %p228 = pneg %p61
      $region14: #{_lambda_.1} parent=11 // pred_check_branch
        %230 = sbr.rel (%p228) target = $region16
      $region15: #{_lambda_.1} parent=11 // pred_region
        _
      $region16: #{_lambda_.1} parent=11 // pred_fallthru
        _
      // Predicated region
      $region17: #{_lambda_.1} parent=11 // pred_check
        %p231 = pneg %p82
      $region18: #{_lambda_.1} parent=11 // pred_check_branch
        %233 = sbr.rel (%p231) target = $region20
      $region19: #{_lambda_.1} parent=11 // pred_region
        _
      $region20: #{_lambda_.1} parent=11 // pred_fallthru
        _
      // Predicated region
      $region21: #{_lambda_.1} parent=11 // pred_check
        %p234 = pneg %p103
      $region22: #{_lambda_.1} parent=11 // pred_check_branch
        %236 = sbr.rel (%p234) target = $region24
      $region23: #{_lambda_.1} parent=11 // pred_region
        _
      $region24: #{_lambda_.1} parent=11 // pred_fallthru
        _
      // Predicated region
      $region25: #{_lambda_.1} parent=11 // pred_check
        %p237 = pneg %p124
      $region26: #{_lambda_.1} parent=11 // pred_check_branch
        %239 = sbr.rel (%p237) target = $region28
      $region27: #{_lambda_.1} parent=11 // pred_region
        _
      $region28: #{_lambda_.1} parent=11 // pred_fallthru
        _
      // Predicated region
      $region29: #{_lambda_.1} parent=11 // pred_check
        %p240 = pneg %p145
      $region30: #{_lambda_.1} parent=11 // pred_check_branch
        %242 = sbr.rel (%p240) target = $region32
      $region31: #{_lambda_.1} parent=11 // pred_region
        _
      $region32: #{_lambda_.1} parent=11 // pred_fallthru
        _
      // Predicated region
      $region33: #{_lambda_.1} parent=11 // pred_check
        %p243 = pneg %p166
      $region34: #{_lambda_.1} parent=11 // pred_check_branch
        %245 = sbr.rel (%p243) target = $region36
      $region35: #{_lambda_.1} parent=11 // pred_region
        _
      $region36: #{_lambda_.1} parent=11 // pred_fallthru
        _
      // Predicated region
      $region37: #{_lambda_.1} parent=11 // pred_check
        %p246 = pneg %p187
      $region38: #{_lambda_.1} parent=11 // pred_check_branch
        %248 = sbr.rel (%p246) target = $region40
      $region39: #{_lambda_.1} parent=11 // pred_region
        _
      $region40: #{_lambda_.1} parent=11 // pred_fallthru
        _
    $region12: #{_lambda_.1} parent=5 // pred_fallthru
      _
    %p249 = scmp.lt.s32.totalorder %s14, 2
    // Predicated region
    $region41: #{_lambda_.1} parent=5 // pred_check
      %p250 = pneg %p249
    $region42: #{_lambda_.1} parent=5 // pred_check_branch
      %252 = sbr.rel (%p250) target = $region44
    $region43: #{_lambda_.1} parent=5 // pred_region
      // Predicated region
      $region45: #{_lambda_.1} parent=43 // pred_check
        %p253 = pneg %p34
      $region46: #{_lambda_.1} parent=43 // pred_check_branch
        %255 = sbr.rel (%p253) target = $region48
      $region47: #{_lambda_.1} parent=43 // pred_region
        %s256 = smul.u32 9, %s14
        %p257 = scmp.lt.s32.totalorder %s256, 17
        %s258 = scalar_select %p257, %s256, 17
        %s259 = smul.addr %s258, 8
        %s260 = scalar_lea.vmem %s0, %s259
        %s261 = smul.u32 9, %s14
      $region48: #{_lambda_.1} parent=43 // pred_fallthru
        _
    $region44: #{_lambda_.1} parent=5 // pred_fallthru
      _
    %p262 = scmp.le.s32.totalorder 1, %s14
    %p263 = scmp.lt.s32.totalorder %s14, 3
    %p264 = pnand %p262, %p263
    %p265 = pneg %p264
    // Predicated region
    $region49: #{_lambda_.1} parent=5 // pred_check
      _
    $region50: #{_lambda_.1} parent=5 // pred_check_branch
      %267 = sbr.rel (%p264) target = $region52
    $region51: #{_lambda_.1} parent=5 // pred_region
      %s268 = ssub.s32 %s14, 1
      %s269 = smul.u32 9, %s19
      %p270 = scmp.lt.s32.totalorder %s269, 17
      %s271 = scalar_select %p270, %s269, 17
      %s272 = smul.addr %s271, 8
      %s273 = scalar_lea.vmem %s0, %s272
      %p274 = pneg %p40
      %p275 = pneg %p37
      %p276 = pneg %p61
      %p277 = pneg %p58
      %p278 = pneg %p82
      %p279 = pneg %p79
      %p280 = pneg %p103
      %p281 = pneg %p100
      %p282 = pneg %p124
      %p283 = pneg %p121
      %p284 = pneg %p145
      %p285 = pneg %p142
      %p286 = pneg %p166
      %p287 = pneg %p163
      %p288 = pneg %p187
      %p289 = pneg %p184
      %p290 = pneg %p213
      %p291 = pneg %p210
      %s292 = smul.u32 8, %s19
      %p293 = scmp.lt.s32.totalorder %s292, 15
      %s294 = scalar_select %p293, %s292, 15
      %s295 = smul.addr %s294, 8
      %s296 = scalar_lea.vmem %s8, %s295
      %s297 = smul.u32 9, %s19
      %p298 = scmp.lt.s32.totalorder %s297, 17
      %s299 = scalar_select %p298, %s297, 17
      %s300 = smul.addr %s299, 8
      %s301 = scalar_lea.vmem %s0, %s300
      %s302 = smul.u32 9, %s19
      %s303 = smul.u32 8, %s19
      %p304 = scmp.lt.s32.totalorder %s303, 15
      %s305 = scalar_select %p304, %s303, 15
      %s306 = smul.addr %s305, 8
      %s307 = scalar_lea.vmem %s8, %s306
      %s308 = smul.u32 8, %s19
      %v309 = vld [vmem:[%s301] sm:$0xff]
      %v310 = vld [vmem:[%s301 + $0x8] sm:$0xff]
      %v311 = vld [vmem:[%s301 + $0x10] sm:$0xff]
      %v312 = vld [vmem:[%s301 + $0x18] sm:$0xff]
      %v313 = vld [vmem:[%s301 + $0x20] sm:$0xff]
      %v314 = vld [vmem:[%s301 + $0x28] sm:$0xff]
      %v315 = vld [vmem:[%s301 + $0x30] sm:$0xff]
      %v316 = vld [vmem:[%s301 + $0x38] sm:$0xff]
      %v317 = vld [vmem:[%s301 + $0x40] sm:$0xff]
      %v318 = vld [vmem:[%s1] sm:$0xff]
      %v319 = vld [vmem:[%s1 + $0x8] sm:$0xff]
      %v320 = vld [vmem:[%s1 + $0x10] sm:$0xff]
      %v321 = vld [vmem:[%s1 + $0x18] sm:$0xf]
      %v322 = vld [vmem:[%s1 + $0x20] sm:$0xf]
      %v323 = vld [vmem:[%s1 + $0x28] sm:$0xf]
      %v324 = vld [vmem:[%s2] sm:$0xff]
      %v325 = vld [vmem:[%s2 + $0x8] sm:$0xff]
      %v326 = vld [vmem:[%s2 + $0x10] sm:$0xff]
      %v327 = vld [vmem:[%s2 + $0x18] sm:$0xf]
      %v328 = vld [vmem:[%s2 + $0x20] sm:$0xf]
      %v329 = vld [vmem:[%s2 + $0x28] sm:$0xf]
      %vm339 = vcmask 1046528
      %v340 = vrot.slane %v309, 1
      %v341 = vrot.slane %v310, 1
      %v342 = vsel %vm339, %v340, %v341
      %v343 = vrot.slane %v311, 1
      %v344 = vsel %vm339, %v341, %v343
      %v345 = vrot.slane %v312, 1
      %v346 = vsel %vm339, %v343, %v345
      %v347 = vrot.slane %v313, 1
      %v348 = vsel %vm339, %v345, %v347
      %v349 = vrot.slane %v314, 1
      %v350 = vsel %vm339, %v347, %v349
      %v351 = vrot.slane %v315, 1
      %v352 = vsel %vm339, %v349, %v351
      %v353 = vrot.slane %v316, 1
      %v354 = vsel %vm339, %v351, %v353
      %v355 = vrot.slane %v317, 1
      %v356 = vsel %vm339, %v353, %v355
      %vm357 = vcmask 97280
      %v358 = vsel %vm357, %v342, 0
      %v360 = vsel %vm357, %v344, 0
      %v362 = vsel %vm357, %v346, 0
      %v364 = vsel %vm357, %v348, 0
      %v366 = vsel %vm357, %v350, 0
      %v368 = vsel %vm357, %v352, 0
      %v370 = vsel %vm357, %v354, 0
      %v372 = vsel %vm357, %v356, 0
      %v374 = vsel %vm357, %v355, 0
      %vm376 = vcmask 1043456
      %v378 = vsel %vm376, %v327, 0
      %v381 = vsel %vm376, %v328, 0
      %v384 = vsel %vm376, %v329, 0
      %386 = vmatprep.subr.mxu0 %v325
      %387 = vmatpush1.msra.mxu0 %v324
      %388 = vmatprep.subr.mxu0 %v381
      %389 = vmatpush1.msra.mxu0 %v378
      %390 = vmatprep.subr.mxu0 0.0
      %391 = vmatpush1.msra.mxu0 0.0
      %392 = vmatprep.subr.mxu0 0.0
      %393 = vmatpush1.msra.mxu0 0.0
      %394 = vmatprep.subr.mxu0 0.0
      %395 = vmatpush1.msra.mxu0 0.0
      %396 = vmatprep.subr.mxu0 0.0
      %397 = vmatpush1.msra.mxu0 0.0
      %398 = vmatprep.subr.mxu0 0.0
      %399 = vmatpush1.msra.mxu0 0.0
      %400 = vmatprep.subr.mxu0 0.0
      %401 = vmatpush1.msra.mxu0 0.0
      %402 = vmatprep.subr.mxu0 0.0
      %403 = vmatpush1.msra.mxu0 0.0
      %404 = vmatprep.subr.mxu0 0.0
      %405 = vmatpush1.msra.mxu0 0.0
      %406 = vmatprep.subr.mxu0 0.0
      %407 = vmatpush1.msra.mxu0 0.0
      %408 = vmatprep.subr.mxu0 0.0
      %409 = vmatpush1.msra.mxu0 0.0
      %410 = vmatprep.subr.mxu0 0.0
      %411 = vmatpush1.msra.mxu0 0.0
      %412 = vmatprep.subr.mxu0 0.0
      %413 = vmatpush1.msra.mxu0 0.0
      %414 = vmatprep.subr.mxu0 0.0
      %415 = vmatpush1.msra.mxu0 0.0
      %416 = vmatprep.subr.mxu0 0.0
      %417 = vmatpush1.msra.mxu0 0.0
      %418 = vmatprep.subr.mxu0 0.0
      %419 = vmatpush1.msra.mxu0 0.0
      %420 = vmatprep.subr.mxu0 0.0
      %421 = vmatpush1.msra.mxu0 0.0
      %422 = vmatprep.subr.mxu0 0.0
      %423 = vmatpush1.msra.mxu0 0.0
      %424 = vmatprep.subr.mxu0 0.0
      %425 = vmatpush1.msra.mxu0 0.0
      %426 = vmatprep.subr.mxu0 0.0
      %427 = vmatpush1.msra.mxu0 0.0
      %428 = vmatprep.subr.mxu0 0.0
      %429 = vmatpush1.msra.mxu0 0.0
      %430 = vmatprep.subr.mxu0 0.0
      %431 = vmatpush1.msra.mxu0 0.0
      %432 = vmatprep.subr.mxu0 0.0
      %433 = vmatpush1.msra.mxu0 0.0
      %434 = vmatprep.subr.mxu0 0.0
      %435 = vmatpush1.msra.mxu0 0.0
      %436 = vmatprep.subr.mxu0 0.0
      %437 = vmatpush1.msra.mxu0 0.0
      %438 = vmatprep.subr.mxu0 0.0
      %439 = vmatpush1.msra.mxu0 0.0
      %440 = vmatprep.subr.mxu0 0.0
      %441 = vmatpush1.msra.mxu0 0.0
      %442 = vmatprep.subr.mxu0 0.0
      %443 = vmatpush1.msra.mxu0 0.0
      %444 = vmatprep.subr.mxu0 0.0
      %445 = vmatpush1.msra.mxu0 0.0
      %446 = vmatprep.subr.mxu0 0.0
      %447 = vmatpush1.msra.mxu0 0.0
      %448 = vmatprep.subr.mxu0 0.0
      %449 = vmatpush1.msra.mxu0 0.0
      %450 = vmatprep.mubr.f32.mxu0 0.0
      %451 = vmatmul.mubr.f32.gmra.mrb[0].mxu0 %v358
      %v452 = vpop.f32.mrb[0].mxu0
      %v453 = vadd.f32 0.0, %v452
      %v454 = vpop.f32.mrb[0].mxu0
      %v455 = vadd.f32 0.0, %v454
      %456 = vmatprep.mubr.f32.mxu0 0.0
      %457 = vmatmul.mubr.f32.gmra.mrb[0].mxu0 %v360
      %v458 = vpop.f32.mrb[0].mxu0
      %v459 = vadd.f32 0.0, %v458
      %v460 = vpop.f32.mrb[0].mxu0
      %v461 = vadd.f32 0.0, %v460
      %462 = vmatprep.mubr.f32.mxu0 0.0
      %463 = vmatmul.mubr.f32.gmra.mrb[0].mxu0 %v362
      %v464 = vpop.f32.mrb[0].mxu0
      %v465 = vadd.f32 0.0, %v464
      %v466 = vpop.f32.mrb[0].mxu0
      %v467 = vadd.f32 0.0, %v466
      %468 = vmatprep.mubr.f32.mxu0 0.0
      %469 = vmatmul.mubr.f32.gmra.mrb[0].mxu0 %v364
      %v470 = vpop.f32.mrb[0].mxu0
      %v471 = vadd.f32 0.0, %v470
      %v472 = vpop.f32.mrb[0].mxu0
      %v473 = vadd.f32 0.0, %v472
      %474 = vmatprep.mubr.f32.mxu0 0.0
      %475 = vmatmul.mubr.f32.gmra.mrb[0].mxu0 %v366
      %v476 = vpop.f32.mrb[0].mxu0
      %v477 = vadd.f32 0.0, %v476
      %v478 = vpop.f32.mrb[0].mxu0
      %v479 = vadd.f32 0.0, %v478
      %480 = vmatprep.mubr.f32.mxu0 0.0
      %481 = vmatmul.mubr.f32.gmra.mrb[0].mxu0 %v368
      %v482 = vpop.f32.mrb[0].mxu0
      %v483 = vadd.f32 0.0, %v482
      %v484 = vpop.f32.mrb[0].mxu0
      %v485 = vadd.f32 0.0, %v484
      %486 = vmatprep.mubr.f32.mxu0 0.0
      %487 = vmatmul.mubr.f32.gmra.mrb[0].mxu0 %v370
      %v488 = vpop.f32.mrb[0].mxu0
      %v489 = vadd.f32 0.0, %v488
      %v490 = vpop.f32.mrb[0].mxu0
      %v491 = vadd.f32 0.0, %v490
      %492 = vmatprep.mubr.f32.mxu0 0.0
      %493 = vmatmul.mubr.f32.gmra.mrb[0].mxu0 %v372
      %v494 = vpop.f32.mrb[0].mxu0
      %v495 = vadd.f32 0.0, %v494
      %v496 = vpop.f32.mrb[0].mxu0
      %v497 = vadd.f32 0.0, %v496
      %498 = vmatprep.mubr.f32.mxu0 0.0
      %499 = vmatmul.mubr.f32.gmra.mrb[0].mxu0 %v374
      %v500 = vpop.f32.mrb[0].mxu0
      %v501 = vadd.f32 0.0, %v500
      %v502 = vpop.f32.mrb[0].mxu0
      %v503 = vadd.f32 0.0, %v502
      %504 = vdwg.mxu0
      %505 = vmatprep.subr.mxu0 0.0
      %506 = vmatpush1.msra.mxu0 %v326
      %507 = vmatprep.subr.mxu0 0.0
      %508 = vmatpush1.msra.mxu0 %v384
      %509 = vmatprep.subr.mxu0 0.0
      %510 = vmatpush1.msra.mxu0 0.0
      %511 = vmatprep.subr.mxu0 0.0
      %512 = vmatpush1.msra.mxu0 0.0
      %513 = vmatprep.subr.mxu0 0.0
      %514 = vmatpush1.msra.mxu0 0.0
      %515 = vmatprep.subr.mxu0 0.0
      %516 = vmatpush1.msra.mxu0 0.0
      %517 = vmatprep.subr.mxu0 0.0
      %518 = vmatpush1.msra.mxu0 0.0
      %519 = vmatprep.subr.mxu0 0.0
      %520 = vmatpush1.msra.mxu0 0.0
      %521 = vmatprep.subr.mxu0 0.0
      %522 = vmatpush1.msra.mxu0 0.0
      %523 = vmatprep.subr.mxu0 0.0
      %524 = vmatpush1.msra.mxu0 0.0
      %525 = vmatprep.subr.mxu0 0.0
      %526 = vmatpush1.msra.mxu0 0.0
      %527 = vmatprep.subr.mxu0 0.0
      %528 = vmatpush1.msra.mxu0 0.0
      %529 = vmatprep.subr.mxu0 0.0
      %530 = vmatpush1.msra.mxu0 0.0
      %531 = vmatprep.subr.mxu0 0.0
      %532 = vmatpush1.msra.mxu0 0.0
      %533 = vmatprep.subr.mxu0 0.0
      %534 = vmatpush1.msra.mxu0 0.0
      %535 = vmatprep.subr.mxu0 0.0
      %536 = vmatpush1.msra.mxu0 0.0
      %537 = vmatprep.subr.mxu0 0.0
      %538 = vmatpush1.msra.mxu0 0.0
      %539 = vmatprep.subr.mxu0 0.0
      %540 = vmatpush1.msra.mxu0 0.0
      %541 = vmatprep.subr.mxu0 0.0
      %542 = vmatpush1.msra.mxu0 0.0
      %543 = vmatprep.subr.mxu0 0.0
      %544 = vmatpush1.msra.mxu0 0.0
      %545 = vmatprep.subr.mxu0 0.0
      %546 = vmatpush1.msra.mxu0 0.0
      %547 = vmatprep.subr.mxu0 0.0
      %548 = vmatpush1.msra.mxu0 0.0
      %549 = vmatprep.subr.mxu0 0.0
      %550 = vmatpush1.msra.mxu0 0.0
      %551 = vmatprep.subr.mxu0 0.0
      %552 = vmatpush1.msra.mxu0 0.0
      %553 = vmatprep.subr.mxu0 0.0
      %554 = vmatpush1.msra.mxu0 0.0
      %555 = vmatprep.subr.mxu0 0.0
      %556 = vmatpush1.msra.mxu0 0.0
      %557 = vmatprep.subr.mxu0 0.0
      %558 = vmatpush1.msra.mxu0 0.0
      %559 = vmatprep.subr.mxu0 0.0
      %560 = vmatpush1.msra.mxu0 0.0
      %561 = vmatprep.subr.mxu0 0.0
      %562 = vmatpush1.msra.mxu0 0.0
      %563 = vmatprep.subr.mxu0 0.0
      %564 = vmatpush1.msra.mxu0 0.0
      %565 = vmatprep.subr.mxu0 0.0
      %566 = vmatpush1.msra.mxu0 0.0
      %567 = vmatprep.subr.mxu0 0.0
      %568 = vmatpush1.msra.mxu0 0.0
      %569 = vmatprep.mubr.f32.mxu0 0.0
      %570 = vmatmul.mubr.f32.gmra.mrb[0].mxu0 %v358
      %v571 = vpop.f32.mrb[0].mxu0
      %v572 = vadd.f32 0.0, %v571
      %v573 = vpop.f32.mrb[0].mxu0
      %574 = vmatprep.mubr.f32.mxu0 0.0
      %575 = vmatmul.mubr.f32.gmra.mrb[0].mxu0 %v360
      %v576 = vpop.f32.mrb[0].mxu0
      %v577 = vadd.f32 0.0, %v576
      %v578 = vpop.f32.mrb[0].mxu0
      %579 = vmatprep.mubr.f32.mxu0 0.0
      %580 = vmatmul.mubr.f32.gmra.mrb[0].mxu0 %v362
      %v581 = vpop.f32.mrb[0].mxu0
      %v582 = vadd.f32 0.0, %v581
      %v583 = vpop.f32.mrb[0].mxu0
      %584 = vmatprep.mubr.f32.mxu0 0.0
      %585 = vmatmul.mubr.f32.gmra.mrb[0].mxu0 %v364
      %v586 = vpop.f32.mrb[0].mxu0
      %v587 = vadd.f32 0.0, %v586
      %v588 = vpop.f32.mrb[0].mxu0
      %589 = vmatprep.mubr.f32.mxu0 0.0
      %590 = vmatmul.mubr.f32.gmra.mrb[0].mxu0 %v366
      %v591 = vpop.f32.mrb[0].mxu0
      %v592 = vadd.f32 0.0, %v591
      %v593 = vpop.f32.mrb[0].mxu0
      %594 = vmatprep.mubr.f32.mxu0 0.0
      %595 = vmatmul.mubr.f32.gmra.mrb[0].mxu0 %v368
      %v596 = vpop.f32.mrb[0].mxu0
      %v597 = vadd.f32 0.0, %v596
      %v598 = vpop.f32.mrb[0].mxu0
      %599 = vmatprep.mubr.f32.mxu0 0.0
      %600 = vmatmul.mubr.f32.gmra.mrb[0].mxu0 %v370
      %v601 = vpop.f32.mrb[0].mxu0
      %v602 = vadd.f32 0.0, %v601
      %v603 = vpop.f32.mrb[0].mxu0
      %604 = vmatprep.mubr.f32.mxu0 0.0
      %605 = vmatmul.mubr.f32.gmra.mrb[0].mxu0 %v372
      %v606 = vpop.f32.mrb[0].mxu0
      %v607 = vadd.f32 0.0, %v606
      %v608 = vpop.f32.mrb[0].mxu0
      %609 = vmatprep.mubr.f32.mxu0 0.0
      %610 = vmatmul.mubr.f32.gmra.mrb[0].mxu0 %v374
      %v611 = vpop.f32.mrb[0].mxu0
      %v612 = vadd.f32 0.0, %v611
      %v613 = vpop.f32.mrb[0].mxu0
      %614 = vdwg.mxu0
      %v615 = vsel %vm357, %v309, 0
      %v617 = vsel %vm357, %v310, 0
      %v619 = vsel %vm357, %v311, 0
      %v621 = vsel %vm357, %v312, 0
      %v623 = vsel %vm357, %v313, 0
      %v625 = vsel %vm357, %v314, 0
      %v627 = vsel %vm357, %v315, 0
      %v629 = vsel %vm357, %v316, 0
      %v631 = vsel %vm357, %v317, 0
      %v634 = vsel %vm376, %v321, 0
      %v637 = vsel %vm376, %v322, 0
      %v640 = vsel %vm376, %v323, 0
      %642 = vmatprep.subr.mxu0 %v319
      %643 = vmatpush1.msra.mxu0 %v318
      %644 = vmatprep.subr.mxu0 %v637
      %645 = vmatpush1.msra.mxu0 %v634
      %646 = vmatprep.subr.mxu0 0.0
      %647 = vmatpush1.msra.mxu0 0.0
      %648 = vmatprep.subr.mxu0 0.0
      %649 = vmatpush1.msra.mxu0 0.0
      %650 = vmatprep.subr.mxu0 0.0
      %651 = vmatpush1.msra.mxu0 0.0
      %652 = vmatprep.subr.mxu0 0.0
      %653 = vmatpush1.msra.mxu0 0.0
      %654 = vmatprep.subr.mxu0 0.0
      %655 = vmatpush1.msra.mxu0 0.0
      %656 = vmatprep.subr.mxu0 0.0
      %657 = vmatpush1.msra.mxu0 0.0
      %658 = vmatprep.subr.mxu0 0.0
      %659 = vmatpush1.msra.mxu0 0.0
      %660 = vmatprep.subr.mxu0 0.0
      %661 = vmatpush1.msra.mxu0 0.0
      %662 = vmatprep.subr.mxu0 0.0
      %663 = vmatpush1.msra.mxu0 0.0
      %664 = vmatprep.subr.mxu0 0.0
      %665 = vmatpush1.msra.mxu0 0.0
      %666 = vmatprep.subr.mxu0 0.0
      %667 = vmatpush1.msra.mxu0 0.0
      %668 = vmatprep.subr.mxu0 0.0
      %669 = vmatpush1.msra.mxu0 0.0
      %670 = vmatprep.subr.mxu0 0.0
      %671 = vmatpush1.msra.mxu0 0.0
      %672 = vmatprep.subr.mxu0 0.0
      %673 = vmatpush1.msra.mxu0 0.0
      %674 = vmatprep.subr.mxu0 0.0
      %675 = vmatpush1.msra.mxu0 0.0
      %676 = vmatprep.subr.mxu0 0.0
      %677 = vmatpush1.msra.mxu0 0.0
      %678 = vmatprep.subr.mxu0 0.0
      %679 = vmatpush1.msra.mxu0 0.0
      %680 = vmatprep.subr.mxu0 0.0
      %681 = vmatpush1.msra.mxu0 0.0
      %682 = vmatprep.subr.mxu0 0.0
      %683 = vmatpush1.msra.mxu0 0.0
      %684 = vmatprep.subr.mxu0 0.0
      %685 = vmatpush1.msra.mxu0 0.0
      %686 = vmatprep.subr.mxu0 0.0
      %687 = vmatpush1.msra.mxu0 0.0
      %688 = vmatprep.subr.mxu0 0.0
      %689 = vmatpush1.msra.mxu0 0.0
      %690 = vmatprep.subr.mxu0 0.0
      %691 = vmatpush1.msra.mxu0 0.0
      %692 = vmatprep.subr.mxu0 0.0
      %693 = vmatpush1.msra.mxu0 0.0
      %694 = vmatprep.subr.mxu0 0.0
      %695 = vmatpush1.msra.mxu0 0.0
      %696 = vmatprep.subr.mxu0 0.0
      %697 = vmatpush1.msra.mxu0 0.0
      %698 = vmatprep.subr.mxu0 0.0
      %699 = vmatpush1.msra.mxu0 0.0
      %700 = vmatprep.subr.mxu0 0.0
      %701 = vmatpush1.msra.mxu0 0.0
      %702 = vmatprep.subr.mxu0 0.0
      %703 = vmatpush1.msra.mxu0 0.0
      %704 = vmatprep.subr.mxu0 0.0
      %705 = vmatpush1.msra.mxu0 0.0
      %706 = vmatprep.mubr.f32.mxu0 0.0
      %707 = vmatmul.mubr.f32.gmra.mrb[0].mxu0 %v615
      %v708 = vpop.f32.mrb[0].mxu0
      %v709 = vadd.f32 %v453, %v708
      %v710 = vpop.f32.mrb[0].mxu0
      %v711 = vadd.f32 %v455, %v710
      %712 = vmatprep.mubr.f32.mxu0 0.0
      %713 = vmatmul.mubr.f32.gmra.mrb[0].mxu0 %v617
      %v714 = vpop.f32.mrb[0].mxu0
      %v715 = vadd.f32 %v459, %v714
      %v716 = vpop.f32.mrb[0].mxu0
      %v717 = vadd.f32 %v461, %v716
      %718 = vmatprep.mubr.f32.mxu0 0.0
      %719 = vmatmul.mubr.f32.gmra.mrb[0].mxu0 %v619
      %v720 = vpop.f32.mrb[0].mxu0
      %v721 = vadd.f32 %v465, %v720
      %v722 = vpop.f32.mrb[0].mxu0
      %v723 = vadd.f32 %v467, %v722
      %724 = vmatprep.mubr.f32.mxu0 0.0
      %725 = vmatmul.mubr.f32.gmra.mrb[0].mxu0 %v621
      %v726 = vpop.f32.mrb[0].mxu0
      %v727 = vadd.f32 %v471, %v726
      %v728 = vpop.f32.mrb[0].mxu0
      %v729 = vadd.f32 %v473, %v728
      %730 = vmatprep.mubr.f32.mxu0 0.0
      %731 = vmatmul.mubr.f32.gmra.mrb[0].mxu0 %v623
      %v732 = vpop.f32.mrb[0].mxu0
      %v733 = vadd.f32 %v477, %v732
      %v734 = vpop.f32.mrb[0].mxu0
      %v735 = vadd.f32 %v479, %v734
      %736 = vmatprep.mubr.f32.mxu0 0.0
      %737 = vmatmul.mubr.f32.gmra.mrb[0].mxu0 %v625
      %v738 = vpop.f32.mrb[0].mxu0
      %v739 = vadd.f32 %v483, %v738
      %v740 = vpop.f32.mrb[0].mxu0
      %v741 = vadd.f32 %v485, %v740
      %742 = vmatprep.mubr.f32.mxu0 0.0
      %743 = vmatmul.mubr.f32.gmra.mrb[0].mxu0 %v627
      %v744 = vpop.f32.mrb[0].mxu0
      %v745 = vadd.f32 %v489, %v744
      %v746 = vpop.f32.mrb[0].mxu0
      %v747 = vadd.f32 %v491, %v746
      %748 = vmatprep.mubr.f32.mxu0 0.0
      %749 = vmatmul.mubr.f32.gmra.mrb[0].mxu0 %v629
      %v750 = vpop.f32.mrb[0].mxu0
      %v751 = vadd.f32 %v495, %v750
      %v752 = vpop.f32.mrb[0].mxu0
      %v753 = vadd.f32 %v497, %v752
      %754 = vmatprep.mubr.f32.mxu0 0.0
      %755 = vmatmul.mubr.f32.gmra.mrb[0].mxu0 %v631
      %v756 = vpop.f32.mrb[0].mxu0
      %v757 = vadd.f32 %v501, %v756
      %v758 = vpop.f32.mrb[0].mxu0
      %v759 = vadd.f32 %v503, %v758
      %760 = vdwg.mxu0
      %761 = vmatprep.subr.mxu0 0.0
      %762 = vmatpush1.msra.mxu0 %v320
      %763 = vmatprep.subr.mxu0 0.0
      %764 = vmatpush1.msra.mxu0 %v640
      %765 = vmatprep.subr.mxu0 0.0
      %766 = vmatpush1.msra.mxu0 0.0
      %767 = vmatprep.subr.mxu0 0.0
      %768 = vmatpush1.msra.mxu0 0.0
      %769 = vmatprep.subr.mxu0 0.0
      %770 = vmatpush1.msra.mxu0 0.0
      %771 = vmatprep.subr.mxu0 0.0
      %772 = vmatpush1.msra.mxu0 0.0
      %773 = vmatprep.subr.mxu0 0.0
      %774 = vmatpush1.msra.mxu0 0.0
      %775 = vmatprep.subr.mxu0 0.0
      %776 = vmatpush1.msra.mxu0 0.0
      %777 = vmatprep.subr.mxu0 0.0
      %778 = vmatpush1.msra.mxu0 0.0
      %779 = vmatprep.subr.mxu0 0.0
      %780 = vmatpush1.msra.mxu0 0.0
      %781 = vmatprep.subr.mxu0 0.0
      %782 = vmatpush1.msra.mxu0 0.0
      %783 = vmatprep.subr.mxu0 0.0
      %784 = vmatpush1.msra.mxu0 0.0
      %785 = vmatprep.subr.mxu0 0.0
      %786 = vmatpush1.msra.mxu0 0.0
      %787 = vmatprep.subr.mxu0 0.0
      %788 = vmatpush1.msra.mxu0 0.0
      %789 = vmatprep.subr.mxu0 0.0
      %790 = vmatpush1.msra.mxu0 0.0
      %791 = vmatprep.subr.mxu0 0.0
      %792 = vmatpush1.msra.mxu0 0.0
      %793 = vmatprep.subr.mxu0 0.0
      %794 = vmatpush1.msra.mxu0 0.0
      %795 = vmatprep.subr.mxu0 0.0
      %796 = vmatpush1.msra.mxu0 0.0
      %797 = vmatprep.subr.mxu0 0.0
      %798 = vmatpush1.msra.mxu0 0.0
      %799 = vmatprep.subr.mxu0 0.0
      %800 = vmatpush1.msra.mxu0 0.0
      %801 = vmatprep.subr.mxu0 0.0
      %802 = vmatpush1.msra.mxu0 0.0
      %803 = vmatprep.subr.mxu0 0.0
      %804 = vmatpush1.msra.mxu0 0.0
      %805 = vmatprep.subr.mxu0 0.0
      %806 = vmatpush1.msra.mxu0 0.0
      %807 = vmatprep.subr.mxu0 0.0
      %808 = vmatpush1.msra.mxu0 0.0
      %809 = vmatprep.subr.mxu0 0.0
      %810 = vmatpush1.msra.mxu0 0.0
      %811 = vmatprep.subr.mxu0 0.0
      %812 = vmatpush1.msra.mxu0 0.0
      %813 = vmatprep.subr.mxu0 0.0
      %814 = vmatpush1.msra.mxu0 0.0
      %815 = vmatprep.subr.mxu0 0.0
      %816 = vmatpush1.msra.mxu0 0.0
      %817 = vmatprep.subr.mxu0 0.0
      %818 = vmatpush1.msra.mxu0 0.0
      %819 = vmatprep.subr.mxu0 0.0
      %820 = vmatpush1.msra.mxu0 0.0
      %821 = vmatprep.subr.mxu0 0.0
      %822 = vmatpush1.msra.mxu0 0.0
      %823 = vmatprep.subr.mxu0 0.0
      %824 = vmatpush1.msra.mxu0 0.0
      %825 = vmatprep.mubr.f32.mxu0 0.0
      %826 = vmatmul.mubr.f32.gmra.mrb[0].mxu0 %v615
      %v827 = vpop.f32.mrb[0].mxu0
      %v828 = vadd.f32 %v572, %v827
      %v829 = vpop.f32.mrb[0].mxu0
      %830 = vmatprep.mubr.f32.mxu0 0.0
      %831 = vmatmul.mubr.f32.gmra.mrb[0].mxu0 %v617
      %v832 = vpop.f32.mrb[0].mxu0
      %v833 = vadd.f32 %v577, %v832
      %v834 = vpop.f32.mrb[0].mxu0
      %835 = vmatprep.mubr.f32.mxu0 0.0
      %836 = vmatmul.mubr.f32.gmra.mrb[0].mxu0 %v619
      %v837 = vpop.f32.mrb[0].mxu0
      %v838 = vadd.f32 %v582, %v837
      %v839 = vpop.f32.mrb[0].mxu0
      %840 = vmatprep.mubr.f32.mxu0 0.0
      %841 = vmatmul.mubr.f32.gmra.mrb[0].mxu0 %v621
      %v842 = vpop.f32.mrb[0].mxu0
      %v843 = vadd.f32 %v587, %v842
      %v844 = vpop.f32.mrb[0].mxu0
      %845 = vmatprep.mubr.f32.mxu0 0.0
      %846 = vmatmul.mubr.f32.gmra.mrb[0].mxu0 %v623
      %v847 = vpop.f32.mrb[0].mxu0
      %v848 = vadd.f32 %v592, %v847
      %v849 = vpop.f32.mrb[0].mxu0
      %850 = vmatprep.mubr.f32.mxu0 0.0
      %851 = vmatmul.mubr.f32.gmra.mrb[0].mxu0 %v625
      %v852 = vpop.f32.mrb[0].mxu0
      %v853 = vadd.f32 %v597, %v852
      %v854 = vpop.f32.mrb[0].mxu0
      %855 = vmatprep.mubr.f32.mxu0 0.0
      %856 = vmatmul.mubr.f32.gmra.mrb[0].mxu0 %v627
      %v857 = vpop.f32.mrb[0].mxu0
      %v858 = vadd.f32 %v602, %v857
      %v859 = vpop.f32.mrb[0].mxu0
      %860 = vmatprep.mubr.f32.mxu0 0.0
      %861 = vmatmul.mubr.f32.gmra.mrb[0].mxu0 %v629
      %v862 = vpop.f32.mrb[0].mxu0
      %v863 = vadd.f32 %v607, %v862
      %v864 = vpop.f32.mrb[0].mxu0
      %865 = vmatprep.mubr.f32.mxu0 0.0
      %866 = vmatmul.mubr.f32.gmra.mrb[0].mxu0 %v631
      %v867 = vpop.f32.mrb[0].mxu0
      %v868 = vadd.f32 %v612, %v867
      %v869 = vpop.f32.mrb[0].mxu0
      %870 = vdwg.mxu0
      %v871 = vld [vmem:[%s3] sm:$0x7]
      %v873 = vlaneseq
      %v874 = vshrl.u32 %v873, 7
      %v875 = vsub.s32 0, %v874
      %v876 = vrot.slane %v871, %v875
      %v877 = vlaneseq
      %v878 = vshrl.u32 %v877, 7
      %v879 = vsub.s32 1, %v878
      %v880 = vrot.slane %v871, %v879
      %v881 = vlaneseq
      %v882 = vshrl.u32 %v881, 7
      %v883 = vsub.s32 2, %v882
      %v884 = vrot.slane %v871, %v883
      %v888 = vadd.f32 %v709, %v876
      %v889 = vadd.f32 %v711, %v880
      %v890 = vadd.f32 %v828, %v884
      %v891 = vadd.f32 %v715, %v876
      %v892 = vadd.f32 %v717, %v880
      %v893 = vadd.f32 %v833, %v884
      %v894 = vadd.f32 %v721, %v876
      %v895 = vadd.f32 %v723, %v880
      %v896 = vadd.f32 %v838, %v884
      %v897 = vadd.f32 %v727, %v876
      %v898 = vadd.f32 %v729, %v880
      %v899 = vadd.f32 %v843, %v884
      %v900 = vadd.f32 %v733, %v876
      %v901 = vadd.f32 %v735, %v880
      %v902 = vadd.f32 %v848, %v884
      %v903 = vadd.f32 %v739, %v876
      %v904 = vadd.f32 %v741, %v880
      %v905 = vadd.f32 %v853, %v884
      %v906 = vadd.f32 %v745, %v876
      %v907 = vadd.f32 %v747, %v880
      %v908 = vadd.f32 %v858, %v884
      %v909 = vadd.f32 %v751, %v876
      %v910 = vadd.f32 %v753, %v880
      %v911 = vadd.f32 %v863, %v884
      %v912 = vadd.f32 %v757, %v876
      %v913 = vadd.f32 %v759, %v880
      %v914 = vadd.f32 %v868, %v884
      %v915 = vmax.f32 %v888, 0.0
      %v916 = vmax.f32 %v889, 0.0
      %v917 = vmax.f32 %v890, 0.0
      %v918 = vmax.f32 %v891, 0.0
      %v919 = vmax.f32 %v892, 0.0
      %v920 = vmax.f32 %v893, 0.0
      %v921 = vmax.f32 %v894, 0.0
      %v922 = vmax.f32 %v895, 0.0
      %v923 = vmax.f32 %v896, 0.0
      %v924 = vmax.f32 %v897, 0.0
      %v925 = vmax.f32 %v898, 0.0
      %v926 = vmax.f32 %v899, 0.0
      %v927 = vmax.f32 %v900, 0.0
      %v928 = vmax.f32 %v901, 0.0
      %v929 = vmax.f32 %v902, 0.0
      %v930 = vmax.f32 %v903, 0.0
      %v931 = vmax.f32 %v904, 0.0
      %v932 = vmax.f32 %v905, 0.0
      %v933 = vmax.f32 %v906, 0.0
      %v934 = vmax.f32 %v907, 0.0
      %v935 = vmax.f32 %v908, 0.0
      %v936 = vmax.f32 %v909, 0.0
      %v937 = vmax.f32 %v910, 0.0
      %v938 = vmax.f32 %v911, 0.0
      %v939 = vmax.f32 %v912, 0.0
      %v940 = vmax.f32 %v913, 0.0
      %v941 = vmax.f32 %v914, 0.0
      %v942 = vmax.f32 %v915, %v916
      %v943 = vmax.f32 %v918, %v919
      %v944 = vmax.f32 %v921, %v922
      %v945 = vmax.f32 %v924, %v925
      %v946 = vmax.f32 %v927, %v928
      %v947 = vmax.f32 %v930, %v931
      %v948 = vmax.f32 %v933, %v934
      %v949 = vmax.f32 %v936, %v937
      %v950 = vmax.f32 %v939, %v940
      %v951 = vmax.f32 %v942, %v917
      %v952 = vmax.f32 %v943, %v920
      %v953 = vmax.f32 %v944, %v923
      %v954 = vmax.f32 %v945, %v926
      %v955 = vmax.f32 %v946, %v929
      %v956 = vmax.f32 %v947, %v932
      %v957 = vmax.f32 %v948, %v935
      %v958 = vmax.f32 %v949, %v938
      %v959 = vmax.f32 %v950, %v941
      %v960 = vlaneseq
      %v961 = vshrl.u32 %v960, 7
      %v962 = vrot.slane %v951, 4
      %v963 = vmax.f32 %v951, %v962
      %v964 = vrot.slane %v963, 2
      %v965 = vmax.f32 %v963, %v964
      %v966 = vrot.slane %v965, 1
      %v967 = vmax.f32 %v965, %v966
      %vm968 = vcmp.eq.s32.totalorder %v961, 0
      %v969 = vsel %vm968, %v967, 0.0
      %vm970 = vcmask 1047553
      %v971 = vsel %vm970, %v952, -inf
      %vm972 = vcmask 1040384
      %v973 = vsel %vm972, %v953, -inf
      %v974 = vmax.f32 %v971, %v973
      %v975 = vrot.slane %v974, 4
      %v976 = vmax.f32 %v974, %v975
      %v977 = vrot.slane %v976, 2
      %v978 = vmax.f32 %v976, %v977
      %v979 = vrot.slane %v978, 1
      %v980 = vmax.f32 %v978, %v979
      %vm981 = vcmp.eq.s32.totalorder %v961, 1
      %v982 = vsel %vm981, %v980, %v969
      %vm983 = vcmask 1047554
      %v984 = vsel %vm983, %v953, -inf
      %vm985 = vcmask 1041408
      %v986 = vsel %vm985, %v954, -inf
      %v987 = vmax.f32 %v984, %v986
      %v988 = vrot.slane %v987, 4
      %v989 = vmax.f32 %v987, %v988
      %v990 = vrot.slane %v989, 2
      %v991 = vmax.f32 %v989, %v990
      %v992 = vrot.slane %v991, 1
      %v993 = vmax.f32 %v991, %v992
      %vm994 = vcmp.eq.s32.totalorder %v961, 2
      %v995 = vsel %vm994, %v993, %v982
      %vm996 = vcmask 1047555
      %v997 = vsel %vm996, %v954, -inf
      %vm998 = vcmask 1042432
      %v999 = vsel %vm998, %v955, -inf
      %v1000 = vmax.f32 %v997, %v999
      %v1001 = vrot.slane %v1000, 4
      %v1002 = vmax.f32 %v1000, %v1001
      %v1003 = vrot.slane %v1002, 2
      %v1004 = vmax.f32 %v1002, %v1003
      %v1005 = vrot.slane %v1004, 1
      %v1006 = vmax.f32 %v1004, %v1005
      %vm1007 = vcmp.eq.s32.totalorder %v961, 3
      %v1008 = vsel %vm1007, %v1006, %v995
      %vm1009 = vcmask 1047556
      %v1010 = vsel %vm1009, %v955, -inf
      %v1011 = vsel %vm376, %v956, -inf
      %v1012 = vmax.f32 %v1010, %v1011
      %v1013 = vrot.slane %v1012, 4
      %v1014 = vmax.f32 %v1012, %v1013
      %v1015 = vrot.slane %v1014, 2
      %v1016 = vmax.f32 %v1014, %v1015
      %v1017 = vrot.slane %v1016, 1
      %v1018 = vmax.f32 %v1016, %v1017
      %vm1019 = vcmp.eq.s32.totalorder %v961, 4
      %v1020 = vsel %vm1019, %v1018, %v1008
      %vm1021 = vcmask 1047557
      %v1022 = vsel %vm1021, %v956, -inf
      %vm1023 = vcmask 1044480
      %v1024 = vsel %vm1023, %v957, -inf
      %v1025 = vmax.f32 %v1022, %v1024
      %v1026 = vrot.slane %v1025, 4
      %v1027 = vmax.f32 %v1025, %v1026
      %v1028 = vrot.slane %v1027, 2
      %v1029 = vmax.f32 %v1027, %v1028
      %v1030 = vrot.slane %v1029, 1
      %v1031 = vmax.f32 %v1029, %v1030
      %vm1032 = vcmp.eq.s32.totalorder %v961, 5
      %v1033 = vsel %vm1032, %v1031, %v1020
      %vm1034 = vcmask 1047558
      %v1035 = vsel %vm1034, %v957, -inf
      %vm1036 = vcmask 1045504
      %v1037 = vsel %vm1036, %v958, -inf
      %v1038 = vmax.f32 %v1035, %v1037
      %v1039 = vrot.slane %v1038, 4
      %v1040 = vmax.f32 %v1038, %v1039
      %v1041 = vrot.slane %v1040, 2
      %v1042 = vmax.f32 %v1040, %v1041
      %v1043 = vrot.slane %v1042, 1
      %v1044 = vmax.f32 %v1042, %v1043
      %vm1045 = vcmp.eq.s32.totalorder %v961, 6
      %v1046 = vsel %vm1045, %v1044, %v1033
      %vm1047 = vcmask 1047559
      %v1048 = vsel %vm1047, %v958, -inf
      %v1049 = vsel %vm339, %v959, -inf
      %v1050 = vmax.f32 %v1048, %v1049
      %v1051 = vrot.slane %v1050, 4
      %v1052 = vmax.f32 %v1050, %v1051
      %v1053 = vrot.slane %v1052, 2
      %v1054 = vmax.f32 %v1052, %v1053
      %v1055 = vrot.slane %v1054, 1
      %v1056 = vmax.f32 %v1054, %v1055
      %vm1057 = vcmp.eq.s32.totalorder %v961, 7
      %v1058 = vsel %vm1057, %v1056, %v1046
      %v1059 = vld [vmem:[%s4] sm:$0xff]
      %v1060 = vld [vmem:[%s4 + $0x8] sm:$0xff]
      %v1061 = vld [vmem:[%s4 + $0x10] sm:$0xff]
      %v1062 = vld [vmem:[%s4 + $0x18] sm:$0xff]
      %v1063 = vld [vmem:[%s4 + $0x20] sm:$0xff]
      %v1064 = vld [vmem:[%s4 + $0x28] sm:$0xff]
      %v1065 = vld [vmem:[%s4 + $0x30] sm:$0xff]
      %v1066 = vld [vmem:[%s4 + $0x38] sm:$0xff]
      %v1067 = vld [vmem:[%s4 + $0x40] sm:$0xff]
      %v1068 = vld [vmem:[%s4 + $0x48] sm:$0xff]
      %v1069 = vld [vmem:[%s4 + $0x50] sm:$0xff]
      %v1070 = vld [vmem:[%s4 + $0x58] sm:$0xff]
      %v1071 = vld [vmem:[%s4 + $0x60] sm:$0xff]
      %v1072 = vld [vmem:[%s4 + $0x68] sm:$0xff]
      %v1073 = vld [vmem:[%s4 + $0x70] sm:$0xff]
      %v1074 = vld [vmem:[%s4 + $0x78] sm:$0xff]
      %v1075 = vld [vmem:[%s5] sm:$0x1]
      %v1077 = vlaneseq
      %v1078 = vshrl.u32 %v1077, 7
      %v1079 = vsub.s32 0, %v1078
      %v1080 = vrot.slane %v1075, %v1079
      %1082 = vmatprep.subr.mxu0 0.0
      %1083 = vmatpush1.msra.mxu0 %v1059
      %1084 = vmatprep.subr.mxu0 0.0
      %1085 = vmatpush1.msra.mxu0 %v1060
      %1086 = vmatprep.subr.mxu0 0.0
      %1087 = vmatpush1.msra.mxu0 %v1061
      %1088 = vmatprep.subr.mxu0 0.0
      %1089 = vmatpush1.msra.mxu0 %v1062
      %1090 = vmatprep.subr.mxu0 0.0
      %1091 = vmatpush1.msra.mxu0 %v1063
      %1092 = vmatprep.subr.mxu0 0.0
      %1093 = vmatpush1.msra.mxu0 %v1064
      %1094 = vmatprep.subr.mxu0 0.0
      %1095 = vmatpush1.msra.mxu0 %v1065
      %1096 = vmatprep.subr.mxu0 0.0
      %1097 = vmatpush1.msra.mxu0 %v1066
      %1098 = vmatprep.subr.mxu0 0.0
      %1099 = vmatpush1.msra.mxu0 %v1067
      %1100 = vmatprep.subr.mxu0 0.0
      %1101 = vmatpush1.msra.mxu0 %v1068
      %1102 = vmatprep.subr.mxu0 0.0
      %1103 = vmatpush1.msra.mxu0 %v1069
      %1104 = vmatprep.subr.mxu0 0.0
      %1105 = vmatpush1.msra.mxu0 %v1070
      %1106 = vmatprep.subr.mxu0 0.0
      %1107 = vmatpush1.msra.mxu0 %v1071
      %1108 = vmatprep.subr.mxu0 0.0
      %1109 = vmatpush1.msra.mxu0 %v1072
      %1110 = vmatprep.subr.mxu0 0.0
      %1111 = vmatpush1.msra.mxu0 %v1073
      %1112 = vmatprep.subr.mxu0 0.0
      %1113 = vmatpush1.msra.mxu0 %v1074
      %1114 = vmatprep.subr.mxu0 0.0
      %1115 = vmatpush1.msra.mxu0 0.0
      %1116 = vmatprep.subr.mxu0 0.0
      %1117 = vmatpush1.msra.mxu0 0.0
      %1118 = vmatprep.subr.mxu0 0.0
      %1119 = vmatpush1.msra.mxu0 0.0
      %1120 = vmatprep.subr.mxu0 0.0
      %1121 = vmatpush1.msra.mxu0 0.0
      %1122 = vmatprep.subr.mxu0 0.0
      %1123 = vmatpush1.msra.mxu0 0.0
      %1124 = vmatprep.subr.mxu0 0.0
      %1125 = vmatpush1.msra.mxu0 0.0
      %1126 = vmatprep.subr.mxu0 0.0
      %1127 = vmatpush1.msra.mxu0 0.0
      %1128 = vmatprep.subr.mxu0 0.0
      %1129 = vmatpush1.msra.mxu0 0.0
      %1130 = vmatprep.subr.mxu0 0.0
      %1131 = vmatpush1.msra.mxu0 0.0
      %1132 = vmatprep.subr.mxu0 0.0
      %1133 = vmatpush1.msra.mxu0 0.0
      %1134 = vmatprep.subr.mxu0 0.0
      %1135 = vmatpush1.msra.mxu0 0.0
      %1136 = vmatprep.subr.mxu0 0.0
      %1137 = vmatpush1.msra.mxu0 0.0
      %1138 = vmatprep.subr.mxu0 0.0
      %1139 = vmatpush1.msra.mxu0 0.0
      %1140 = vmatprep.subr.mxu0 0.0
      %1141 = vmatpush1.msra.mxu0 0.0
      %1142 = vmatprep.subr.mxu0 0.0
      %1143 = vmatpush1.msra.mxu0 0.0
      %1144 = vmatprep.subr.mxu0 0.0
      %1145 = vmatpush1.msra.mxu0 0.0
      %1146 = vmatprep.mubr.f32.mxu0 0.0
      %1147 = vmatmul.mubr.f32.gmra.mrb[0].mxu0 %v1058
      %v1148 = vpop.f32.mrb[0].mxu0
      %v1149 = vadd.f32 %v1080, %v1148
      %v1150 = vpop.f32.mrb[0].mxu0
      %1151 = vdwg.mxu0
      %v1152 = vmax.f32 %v1149, 0.0
      %v1153 = vld [vmem:[%s6] sm:$0xff]
      %v1154 = vld [vmem:[%s6 + $0x8] sm:$0xff]
      %v1155 = vld [vmem:[%s6 + $0x10] sm:$0xff]
      %v1156 = vld [vmem:[%s6 + $0x18] sm:$0xff]
      %v1157 = vld [vmem:[%s6 + $0x20] sm:$0xff]
      %v1158 = vld [vmem:[%s6 + $0x28] sm:$0xff]
      %v1159 = vld [vmem:[%s6 + $0x30] sm:$0xff]
      %v1160 = vld [vmem:[%s6 + $0x38] sm:$0xff]
      %v1161 = vld [vmem:[%s6 + $0x40] sm:$0xff]
      %v1162 = vld [vmem:[%s6 + $0x48] sm:$0xff]
      %v1163 = vld [vmem:[%s6 + $0x50] sm:$0xff]
      %v1164 = vld [vmem:[%s6 + $0x58] sm:$0xff]
      %v1165 = vld [vmem:[%s6 + $0x60] sm:$0xff]
      %v1166 = vld [vmem:[%s6 + $0x68] sm:$0xff]
      %v1167 = vld [vmem:[%s6 + $0x70] sm:$0xff]
      %v1168 = vld [vmem:[%s6 + $0x78] sm:$0xff]
      %v1169 = vld [vmem:[%s7] sm:$0x1]
      %v1171 = vlaneseq
      %v1172 = vshrl.u32 %v1171, 7
      %v1173 = vsub.s32 0, %v1172
      %v1174 = vrot.slane %v1169, %v1173
      %1176 = vmatprep.subr.mxu0 0.0
      %1177 = vmatpush1.msra.mxu0 %v1153
      %1178 = vmatprep.subr.mxu0 0.0
      %1179 = vmatpush1.msra.mxu0 %v1154
      %1180 = vmatprep.subr.mxu0 0.0
      %1181 = vmatpush1.msra.mxu0 %v1155
      %1182 = vmatprep.subr.mxu0 0.0
      %1183 = vmatpush1.msra.mxu0 %v1156
      %1184 = vmatprep.subr.mxu0 0.0
      %1185 = vmatpush1.msra.mxu0 %v1157
      %1186 = vmatprep.subr.mxu0 0.0
      %1187 = vmatpush1.msra.mxu0 %v1158
      %1188 = vmatprep.subr.mxu0 0.0
      %1189 = vmatpush1.msra.mxu0 %v1159
      %1190 = vmatprep.subr.mxu0 0.0
      %1191 = vmatpush1.msra.mxu0 %v1160
      %1192 = vmatprep.subr.mxu0 0.0
      %1193 = vmatpush1.msra.mxu0 %v1161
      %1194 = vmatprep.subr.mxu0 0.0
      %1195 = vmatpush1.msra.mxu0 %v1162
      %1196 = vmatprep.subr.mxu0 0.0
      %1197 = vmatpush1.msra.mxu0 %v1163
      %1198 = vmatprep.subr.mxu0 0.0
      %1199 = vmatpush1.msra.mxu0 %v1164
      %1200 = vmatprep.subr.mxu0 0.0
      %1201 = vmatpush1.msra.mxu0 %v1165
      %1202 = vmatprep.subr.mxu0 0.0
      %1203 = vmatpush1.msra.mxu0 %v1166
      %1204 = vmatprep.subr.mxu0 0.0
      %1205 = vmatpush1.msra.mxu0 %v1167
      %1206 = vmatprep.subr.mxu0 0.0
      %1207 = vmatpush1.msra.mxu0 %v1168
      %1208 = vmatprep.subr.mxu0 0.0
      %1209 = vmatpush1.msra.mxu0 0.0
      %1210 = vmatprep.subr.mxu0 0.0
      %1211 = vmatpush1.msra.mxu0 0.0
      %1212 = vmatprep.subr.mxu0 0.0
      %1213 = vmatpush1.msra.mxu0 0.0
      %1214 = vmatprep.subr.mxu0 0.0
      %1215 = vmatpush1.msra.mxu0 0.0
      %1216 = vmatprep.subr.mxu0 0.0
      %1217 = vmatpush1.msra.mxu0 0.0
      %1218 = vmatprep.subr.mxu0 0.0
      %1219 = vmatpush1.msra.mxu0 0.0
      %1220 = vmatprep.subr.mxu0 0.0
      %1221 = vmatpush1.msra.mxu0 0.0
      %1222 = vmatprep.subr.mxu0 0.0
      %1223 = vmatpush1.msra.mxu0 0.0
      %1224 = vmatprep.subr.mxu0 0.0
      %1225 = vmatpush1.msra.mxu0 0.0
      %1226 = vmatprep.subr.mxu0 0.0
      %1227 = vmatpush1.msra.mxu0 0.0
      %1228 = vmatprep.subr.mxu0 0.0
      %1229 = vmatpush1.msra.mxu0 0.0
      %1230 = vmatprep.subr.mxu0 0.0
      %1231 = vmatpush1.msra.mxu0 0.0
      %1232 = vmatprep.subr.mxu0 0.0
      %1233 = vmatpush1.msra.mxu0 0.0
      %1234 = vmatprep.subr.mxu0 0.0
      %1235 = vmatpush1.msra.mxu0 0.0
      %1236 = vmatprep.subr.mxu0 0.0
      %1237 = vmatpush1.msra.mxu0 0.0
      %1238 = vmatprep.subr.mxu0 0.0
      %1239 = vmatpush1.msra.mxu0 0.0
      %1240 = vmatprep.mubr.f32.mxu0 0.0
      %1241 = vmatmul.mubr.f32.gmra.mrb[0].mxu0 %v1152
      %v1242 = vpop.f32.mrb[0].mxu0
      %v1243 = vadd.f32 %v1174, %v1242
      %v1244 = vpop.f32.mrb[0].mxu0
      %1245 = vdwg.mxu0
      %v1246 = vxor.u32 %v1243, 2147483648
      %v1247 = vmul.f32 %v1246, 1.442695
      %v1248 = vpow.pop %v1247
      %v1249 = vadd.f32 %v1248, 1.0
      %v1250 = vrcp.pop %v1249
      %v1251 = vmul.f32 1.0, %v1250
      %v1252 = vlaneseq
      %v1253 = vshrl.u32 %v1252, 7
      %v1254 = vsub.s32 0, %v1253
      %v1255 = vrot.slane %v1251, %v1254
      %v1256 = vmul.f32 %v951, %v1255
      %1257 = vst [vmem:[%s307] sm:$0xff] %v1256
      %v1258 = vlaneseq
      %v1259 = vshrl.u32 %v1258, 7
      %v1260 = vsub.s32 1, %v1259
      %v1261 = vrot.slane %v1251, %v1260
      %v1262 = vmul.f32 %v952, %v1261
      %v1263 = vmul.f32 %v953, %v1261
      %s1264 = scalar_lea.vmem %s307, 8
      %1265 = vst [vmem:[%s1264 - $0x1] sm:$0xfe] %v1262
      %1266 = vst [vmem:[%s1264 + $0x7] sm:$0x1] %v1263
      %v1267 = vlaneseq
      %v1268 = vshrl.u32 %v1267, 7
      %v1269 = vsub.s32 2, %v1268
      %v1270 = vrot.slane %v1251, %v1269
      %v1271 = vmul.f32 %v953, %v1270
      %v1272 = vmul.f32 %v954, %v1270
      %s1273 = scalar_lea.vmem %s307, 16
      %1274 = vst [vmem:[%s1273 - $0x2] sm:$0xfc] %v1271
      %1275 = vst [vmem:[%s1273 + $0x6] sm:$0x3] %v1272
      %v1276 = vlaneseq
      %v1277 = vshrl.u32 %v1276, 7
      %v1278 = vsub.s32 3, %v1277
      %v1279 = vrot.slane %v1251, %v1278
      %v1280 = vmul.f32 %v954, %v1279
      %v1281 = vmul.f32 %v955, %v1279
      %s1282 = scalar_lea.vmem %s307, 24
      %1283 = vst [vmem:[%s1282 - $0x3] sm:$0xf8] %v1280
      %1284 = vst [vmem:[%s1282 + $0x5] sm:$0x7] %v1281
      %v1285 = vlaneseq
      %v1286 = vshrl.u32 %v1285, 7
      %v1287 = vsub.s32 4, %v1286
      %v1288 = vrot.slane %v1251, %v1287
      %v1289 = vmul.f32 %v955, %v1288
      %v1290 = vmul.f32 %v956, %v1288
      %s1291 = scalar_lea.vmem %s307, 32
      %1292 = vst [vmem:[%s1291 - $0x4] sm:$0xf0] %v1289
      %1293 = vst [vmem:[%s1291 + $0x4] sm:$0xf] %v1290
      %v1294 = vlaneseq
      %v1295 = vshrl.u32 %v1294, 7
      %v1296 = vsub.s32 5, %v1295
      %v1297 = vrot.slane %v1251, %v1296
      %v1298 = vmul.f32 %v956, %v1297
      %v1299 = vmul.f32 %v957, %v1297
      %s1300 = scalar_lea.vmem %s307, 40
      %1301 = vst [vmem:[%s1300 - $0x5] sm:$0xe0] %v1298
      %1302 = vst [vmem:[%s1300 + $0x3] sm:$0x1f] %v1299
      %v1303 = vlaneseq
      %v1304 = vshrl.u32 %v1303, 7
      %v1305 = vsub.s32 6, %v1304
      %v1306 = vrot.slane %v1251, %v1305
      %v1307 = vmul.f32 %v957, %v1306
      %v1308 = vmul.f32 %v958, %v1306
      %s1309 = scalar_lea.vmem %s307, 48
      %1310 = vst [vmem:[%s1309 - $0x6] sm:$0xc0] %v1307
      %1311 = vst [vmem:[%s1309 + $0x2] sm:$0x3f] %v1308
      %v1312 = vlaneseq
      %v1313 = vshrl.u32 %v1312, 7
      %v1314 = vsub.s32 7, %v1313
      %v1315 = vrot.slane %v1251, %v1314
      %v1316 = vmul.f32 %v958, %v1315
      %v1317 = vmul.f32 %v959, %v1315
      %s1318 = scalar_lea.vmem %s307, 56
      %1319 = vst [vmem:[%s1318 - $0x7] sm:$0x80] %v1316
      %1320 = vst [vmem:[%s1318 + $0x1] sm:$0x7f] %v1317
      %s1321 = smul.u32 8, %s19
      %p1322 = scmp.lt.s32.totalorder %s1321, 15
      %s1323 = scalar_select %p1322, %s1321, 15
      %s1324 = smul.addr %s1323, 8
      %s1325 = scalar_lea.vmem %s8, %s1324
      // Predicated region
      $region53: #{_lambda_.1} parent=51 // pred_check
        %p1326 = pneg %p210
      $region54: #{_lambda_.1} parent=51 // pred_check_branch
        %1328 = sbr.rel (%p1326) target = $region56
      $region55: #{_lambda_.1} parent=51 // pred_region
        %s1329 = smul.u32 8, %s19
      $region56: #{_lambda_.1} parent=51 // pred_fallthru
        _
    $region52: #{_lambda_.1} parent=5 // pred_fallthru
      _
    %p1330 = scmp.le.s32.totalorder 2, %s14
    // Predicated region
    $region57: #{_lambda_.1} parent=5 // pred_check
      %p1331 = pneg %p1330
    $region58: #{_lambda_.1} parent=5 // pred_check_branch
      %1333 = sbr.rel (%p1331) target = $region60
    $region59: #{_lambda_.1} parent=5 // pred_region
      %s1334 = ssub.s32 %s14, 2
      // Predicated region
      $region61: #{_lambda_.1} parent=59 // pred_check
        %p1335 = pneg %p216
      $region62: #{_lambda_.1} parent=59 // pred_check_branch
        %1337 = sbr.rel (%p1335) target = $region64
      $region63: #{_lambda_.1} parent=59 // pred_region
        %s1338 = smul.u32 8, %s20
        %p1339 = scmp.lt.s32.totalorder %s1338, 15
        %s1340 = scalar_select %p1339, %s1338, 15
        %s1341 = smul.addr %s1340, 8
        %s1342 = scalar_lea.vmem %s8, %s1341
      $region64: #{_lambda_.1} parent=59 // pred_fallthru
        _
    $region60: #{_lambda_.1} parent=5 // pred_fallthru
      _
  $region6: #{_lambda_.1} parent=0 // loop_footer
    %s18 = sadd.s32 1, %s14
  $region7: #{_lambda_.1} parent=0 // loop_footer_branch
    %13 = sbr.rel target = $region3
  $region8: #{_lambda_.1} parent=0 // loop_exit
    _

</llo_original>
